<compile_context>
chip_gen: v6e
topology: v6e:2x2x1
jax: 0.10.0
libtpu: 0.0.40
codegen_flags: <defaults>
</compile_context>

<pallas_src>
from functools import partial

import jax
import jax.numpy as jnp
from jax import lax
from jax.experimental import pallas as pl
from jax.experimental.pallas import tpu as pltpu

EPS = 1e-5  # PyTorch InstanceNorm2d default


def _round_up(x, m):
    return (x + m - 1) // m * m


# ---------------------------------------------------------------------------
# Fused kernel: concat + pad + conv1 + IN + ReLU + pad + conv2 + IN + ReLU
# (one batch element per grid step, transposed-matmul formulation)
# ---------------------------------------------------------------------------
def _up_conv_kernel(x2_ref, up1_ref, w1_ref, w2_ref, o_ref, pad1_ref, pad2_ref,
                    *, H, W, C1, C2, Cout, LPAD):
    # x2_ref : (1, C2, H*W)   bf16  skip connection, NCHW-flattened
    # up1_ref: (1, C1, H*W)   bf16  upsampled x1, NCHW-flattened
    # w1_ref : (Cout, 9*Cin)  bf16  column = (3*dy + dx)*Cin + cin
    # w2_ref : (Cout, 9*Cout) bf16
    # o_ref  : (1, Cout, H*W) bf16  NCHW-flattened output (lane-dense store)
    # pad1/2 : (C, P) bf16 flat row-padded scratches, interior at lane LPAD
    Cin = C1 + C2
    HW = H * W
    P = LPAD + HW + W + 1

    # Zero the pad borders every step (the interior is fully rewritten below).
    # Unconditional so it stays correct when the batch axis is megacore-split.
    pad1_ref[:, 0:LPAD] = jnp.zeros((Cin, LPAD), jnp.bfloat16)
    pad1_ref[:, LPAD + HW:P] = jnp.zeros((Cin, W + 1), jnp.bfloat16)
    pad2_ref[:, 0:LPAD] = jnp.zeros((Cout, LPAD), jnp.bfloat16)
    pad2_ref[:, LPAD + HW:P] = jnp.zeros((Cout, W + 1), jnp.bfloat16)

    # Fused channel concat [x2, up(x1)]: lane-aligned interior stores.
    pad1_ref[0:C2, LPAD:LPAD + HW] = x2_ref[0]
    pad1_ref[C2:Cin, LPAD:LPAD + HW] = up1_ref[0]

    # Lane masks zeroing the row-wrap columns of the dx=0 / dx=2 taps
    # (flat row-major layout wraps x=-1 / x=W into the adjacent row).
    col = jax.lax.broadcasted_iota(jnp.int32, (1, HW), 1) % W
    keep_l = (col != 0).astype(jnp.bfloat16)
    keep_r = (col != W - 1).astype(jnp.bfloat16)

    def conv3x3_in_relu(pad_ref, w_ref, C):
        """3x3 conv (3 accumulated dy-band matmuls) + InstanceNorm2d + ReLU."""
        acc = jnp.zeros((Cout, HW), jnp.float32)
        for dy in range(3):
            slabs = []
            for dx in range(3):
                s = LPAD - W - 1 + dy * W + dx      # static flat offset of tap (dy,dx)
                slab = pad_ref[:, s:s + HW]          # (C, H*W) bf16, contiguous slice
                if dx == 0:
                    slab = slab * keep_l
                elif dx == 2:
                    slab = slab * keep_r
                slabs.append(slab)
            band = jnp.concatenate(slabs, axis=0)                # (3*C, H*W)
            wband = w_ref[:, dy * 3 * C:(dy + 1) * 3 * C]        # (Cout, 3*C)
            acc = acc + jnp.dot(wband, band,
                                preferred_element_type=jnp.float32)
        # InstanceNorm2d (affine=False, biased var, eps=1e-5) + ReLU; lane reduce.
        mean = jnp.mean(acc, axis=1, keepdims=True)
        cen = acc - mean
        var = jnp.mean(cen * cen, axis=1, keepdims=True)
        return jnp.maximum(cen * jax.lax.rsqrt(var + EPS), 0.0)   # (Cout, HW) f32

    y1 = conv3x3_in_relu(pad1_ref, w1_ref, Cin)
    pad2_ref[:, LPAD:LPAD + HW] = y1.astype(jnp.bfloat16)         # VMEM-resident hop
    y2 = conv3x3_in_relu(pad2_ref, w2_ref, Cout)
    o_ref[0] = y2.astype(o_ref.dtype)


# ---------------------------------------------------------------------------
# Wrapper: gather-free bilinear 2x upsample (XLA) + the fused pallas_call
# ---------------------------------------------------------------------------
def _upsample2x_axis(x, axis):
    """2x bilinear upsample (align_corners=False) along `axis` via static
    0.75/0.25 blends of shifted slices — no gathers.

    out[2i]   = 0.75*x[i] + 0.25*x[i-1]   (i-1 clamped)
    out[2i+1] = 0.75*x[i] + 0.25*x[i+1]   (i+1 clamped)
    """
    n = x.shape[axis]
    sl = partial(lax.slice_in_dim, x, axis=axis)
    lo = jnp.concatenate([sl(0, 1), sl(0, n - 1)], axis=axis)
    hi = jnp.concatenate([sl(1, n), sl(n - 1, n)], axis=axis)
    even = 0.75 * x + 0.25 * lo
    odd = 0.75 * x + 0.25 * hi
    out = jnp.stack([even, odd], axis=axis + 1)
    shape = list(x.shape)
    shape[axis] = 2 * n
    return out.reshape(shape)


def up_forward(x1_nchw, x2_nchw, w1_oihw, w2_oihw):
    """Up.forward: upsample x1 2x (bilinear, align_corners=False), concat with x2
    along channels, then [conv3x3(no bias) -> InstanceNorm2d -> ReLU] x 2.
    Inputs are NCHW f32; output is NCHW bf16."""
    B, C1, H1, W1 = x1_nchw.shape
    B2, C2, H2, W2 = x2_nchw.shape
    assert B2 == B and (H2, W2) == (2 * H1, 2 * W1)
    Cin = C1 + C2
    Cout = w1_oihw.shape[0]
    HW = H2 * W2
    LPAD = _round_up(W2 + 1, 128)        # interior start -> 128-lane aligned
    P = LPAD + HW + W2 + 1               # flat padded spatial length

    # Upsample x1 in NCHW (wrapper side); concat happens inside the kernel.
    up1 = _upsample2x_axis(_upsample2x_axis(x1_nchw, 2), 3)       # (B, C1, H2, W2)
    up1 = up1.reshape(B, C1, HW).astype(jnp.bfloat16)
    x2f = x2_nchw.reshape(B, C2, HW).astype(jnp.bfloat16)

    # OIHW -> (Cout, 9*I); column = (3*dy + dx)*I + i, matching the band build.
    w1 = jnp.transpose(w1_oihw, (0, 2, 3, 1)).reshape(Cout, 9 * Cin).astype(jnp.bfloat16)
    w2 = jnp.transpose(w2_oihw, (0, 2, 3, 1)).reshape(Cout, 9 * Cout).astype(jnp.bfloat16)

    # Scoped-VMEM budget: double-buffered I/O blocks + resident weights + padded
    # scratches + in-flight band/accumulator values, with 2x headroom.
    blocks = 2 * 2 * (C2 * HW + C1 * HW + Cout * HW)               # bf16 blocks
    weights = 2 * (Cout * 9 * Cin + Cout * 9 * Cout)
    scratch = 2 * (Cin + Cout) * P
    live = 2 * 3 * max(Cin, Cout) * HW + 4 * 2 * Cout * HW
    vmem_limit = int(min(max(2 * (blocks + weights + scratch + live),
                             32 * 1024 * 1024), 64 * 1024 * 1024))

    kernel = partial(_up_conv_kernel, H=H2, W=W2, C1=C1, C2=C2, Cout=Cout, LPAD=LPAD)
    out_flat = pl.pallas_call(
        kernel,
        out_shape=jax.ShapeDtypeStruct((B, Cout, HW), jnp.bfloat16),
        grid=(B,),
        in_specs=[
            pl.BlockSpec((1, C2, HW), lambda b: (b, 0, 0)),
            pl.BlockSpec((1, C1, HW), lambda b: (b, 0, 0)),
            pl.BlockSpec((Cout, 9 * Cin), lambda b: (0, 0)),    # weights stay resident
            pl.BlockSpec((Cout, 9 * Cout), lambda b: (0, 0)),
        ],
        out_specs=pl.BlockSpec((1, Cout, HW), lambda b: (b, 0, 0)),
        scratch_shapes=[pltpu.VMEM((Cin, P), jnp.bfloat16),
                        pltpu.VMEM((Cout, P), jnp.bfloat16)],
        compiler_params=pltpu.CompilerParams(
            dimension_semantics=("parallel",),
            vmem_limit_bytes=vmem_limit),
    )(x2f, up1, w1, w2)

    # Free row-major reshape back to (B, Cout, H, W).
    return out_flat.reshape(B, Cout, H2, W2)


# ---------------------------------------------------------------------------
# Pure-JAX f32 reference (independent gather-based upsample + lax.conv + IN)
# ---------------------------------------------------------------------------
def _upsample_ref(x):
    """Gather-based bilinear 2x upsample mirroring torch's coordinate math (NHWC)."""
    B, H, W, C = x.shape

    def coords(n):
        src = (jnp.arange(2 * n, dtype=jnp.float32) + 0.5) * 0.5 - 0.5
        src = jnp.clip(src, 0.0, n - 1)
        i0 = jnp.floor(src).astype(jnp.int32)
        i1 = jnp.minimum(i0 + 1, n - 1)
        return i0, i1, src - i0.astype(jnp.float32)

    r0, r1, rf = coords(H)
    c0, c1, cf = coords(W)
    xr = x[:, r0] * (1 - rf)[None, :, None, None] + x[:, r1] * rf[None, :, None, None]
    return (xr[:, :, c0] * (1 - cf)[None, None, :, None]
            + xr[:, :, c1] * cf[None, None, :, None])


def _ref_block(x_nhwc, w_oihw):
    w = jnp.transpose(w_oihw, (2, 3, 1, 0))                       # HWIO
    y = jax.lax.conv_general_dilated(
        x_nhwc, w, window_strides=(1, 1), padding="SAME",
        dimension_numbers=("NHWC", "HWIO", "NHWC"))
    mean = y.mean(axis=(1, 2), keepdims=True)
    var = ((y - mean) ** 2).mean(axis=(1, 2), keepdims=True)
    return jnp.maximum((y - mean) * jax.lax.rsqrt(var + EPS), 0.0)


def up_forward_ref(x1_nchw, x2_nchw, w1_oihw, w2_oihw):
    x1 = jnp.transpose(x1_nchw, (0, 2, 3, 1))
    x2 = jnp.transpose(x2_nchw, (0, 2, 3, 1))
    x = jnp.concatenate([x2, _upsample_ref(x1)], axis=-1)
    y = _ref_block(_ref_block(x, w1_oihw), w2_oihw)
    return jnp.transpose(y, (0, 3, 1, 2))


# ---------------------------------------------------------------------------
if __name__ == "__main__":
    key = jax.random.PRNGKey(0)
    k1, k2, k3, k4 = jax.random.split(key, 4)

    # x1: low-res feature map, x2: skip connection.
    B, C1, C2, H1, W1 = 2, 8, 8, 8, 8
    H2, W2 = 2 * H1, 2 * W1
    in_channels = C1 + C2          # 16
    out_channels = 16

    x1 = jax.random.normal(k1, (B, C1, H1, W1), jnp.float32)        # NCHW
    x2 = jax.random.normal(k2, (B, C2, H2, W2), jnp.float32)        # NCHW
    w1 = 0.1 * jax.random.normal(k3, (out_channels, in_channels, 3, 3), jnp.float32)
    w2 = 0.1 * jax.random.normal(k4, (out_channels, out_channels, 3, 3), jnp.float32)

    out = jax.block_until_ready(jax.jit(up_forward)(x1, x2, w1, w2))
    ref = jax.block_until_ready(up_forward_ref(x1, x2, w1, w2))

    assert out.shape == (B, out_channels, H2, W2), out.shape
    # bf16 activations / weights / output (f32 MXU accumulation) vs an all-f32
    # reference: tolerance loosened accordingly; structural bugs would be orders
    # of magnitude larger.
    out_f32 = out.astype(jnp.float32)
    max_err = float(jnp.max(jnp.abs(out_f32 - ref)))
    assert jnp.allclose(out_f32, ref, atol=3e-2, rtol=3e-2), max_err

    print("KERNEL_OK")
</pallas_src>

<mosaic_0001>
module attributes {stable_mosaic.version = 11 : i64} {
  func.func @_up_conv_kernel(%arg0: i32, %arg1: memref<1x8x256xbf16, #tpu.memory_space<vmem>>, %arg2: memref<1x8x256xbf16, #tpu.memory_space<vmem>>, %arg3: memref<16x144xbf16, #tpu.memory_space<vmem>>, %arg4: memref<16x144xbf16, #tpu.memory_space<vmem>>, %arg5: memref<1x16x256xbf16, #tpu.memory_space<vmem>>, %arg6: memref<16x401xbf16, #tpu.memory_space<vmem>>, %arg7: memref<16x401xbf16, #tpu.memory_space<vmem>>) attributes {dimension_semantics = [#tpu.dimension_semantics<parallel>], iteration_bounds = array<i64: 2>, scalar_prefetch = 0 : i64, scratch_operands = 2 : i64, tpu.core_type = #tpu.core_type<tc>, window_params = [{transform_indices = @transform_0, window_bounds = array<i64: 1, 8, 256>}, {transform_indices = @transform_1, window_bounds = array<i64: 1, 8, 256>}, {pipeline_mode = #tpu.pipeline_mode<synchronous>, transform_indices = @transform_2, window_bounds = array<i64: 16, 144>}, {pipeline_mode = #tpu.pipeline_mode<synchronous>, transform_indices = @transform_3, window_bounds = array<i64: 16, 144>}, {transform_indices = @transform_4, window_bounds = array<i64: 1, 16, 256>}]} {
    %cst = arith.constant 0.000000e+00 : bf16
    %0 = vector.broadcast %cst : bf16 to vector<16x128xbf16>
    %c0 = arith.constant 0 : index
    %c0_0 = arith.constant 0 : index
    %1 = vector.load %arg6[%c0, %c0_0] : memref<16x401xbf16, #tpu.memory_space<vmem>>, vector<16x128xbf16>
    tpu.vector_store %arg6[%c0, %c0_0], %0 {strides = array<i32>} : memref<16x401xbf16, #tpu.memory_space<vmem>>, vector<16x128xbf16>,
    %cst_1 = arith.constant 0.000000e+00 : bf16
    %2 = vector.broadcast %cst_1 : bf16 to vector<16x17xbf16>
    %c0_2 = arith.constant 0 : index
    %c384 = arith.constant 384 : index
    %3 = vector.load %arg6[%c0_2, %c384] : memref<16x401xbf16, #tpu.memory_space<vmem>>, vector<16x17xbf16>
    tpu.vector_store %arg6[%c0_2, %c384], %2 {strides = array<i32>} : memref<16x401xbf16, #tpu.memory_space<vmem>>, vector<16x17xbf16>,
    %cst_3 = arith.constant 0.000000e+00 : bf16
    %4 = vector.broadcast %cst_3 : bf16 to vector<16x128xbf16>
    %c0_4 = arith.constant 0 : index
    %c0_5 = arith.constant 0 : index
    %5 = vector.load %arg7[%c0_4, %c0_5] : memref<16x401xbf16, #tpu.memory_space<vmem>>, vector<16x128xbf16>
    tpu.vector_store %arg7[%c0_4, %c0_5], %4 {strides = array<i32>} : memref<16x401xbf16, #tpu.memory_space<vmem>>, vector<16x128xbf16>,
    %cst_6 = arith.constant 0.000000e+00 : bf16
    %6 = vector.broadcast %cst_6 : bf16 to vector<16x17xbf16>
    %c0_7 = arith.constant 0 : index
    %c384_8 = arith.constant 384 : index
    %7 = vector.load %arg7[%c0_7, %c384_8] : memref<16x401xbf16, #tpu.memory_space<vmem>>, vector<16x17xbf16>
    tpu.vector_store %arg7[%c0_7, %c384_8], %6 {strides = array<i32>} : memref<16x401xbf16, #tpu.memory_space<vmem>>, vector<16x17xbf16>,
    %c0_9 = arith.constant 0 : index
    %c0_10 = arith.constant 0 : index
    %c0_11 = arith.constant 0 : index
    %8 = vector.load %arg1[%c0_9, %c0_10, %c0_11] : memref<1x8x256xbf16, #tpu.memory_space<vmem>>, vector<1x8x256xbf16>
    %9 = vector.shape_cast %8 : vector<1x8x256xbf16> to vector<8x256xbf16>
    %c0_12 = arith.constant 0 : index
    %c128 = arith.constant 128 : index
    %10 = vector.load %arg6[%c0_12, %c128] : memref<16x401xbf16, #tpu.memory_space<vmem>>, vector<8x256xbf16>
    tpu.vector_store %arg6[%c0_12, %c128], %9 {strides = array<i32>} : memref<16x401xbf16, #tpu.memory_space<vmem>>, vector<8x256xbf16>,
    %c0_13 = arith.constant 0 : index
    %c0_14 = arith.constant 0 : index
    %c0_15 = arith.constant 0 : index
    %11 = vector.load %arg2[%c0_13, %c0_14, %c0_15] : memref<1x8x256xbf16, #tpu.memory_space<vmem>>, vector<1x8x256xbf16>
    %12 = vector.shape_cast %11 : vector<1x8x256xbf16> to vector<8x256xbf16>
    %c8 = arith.constant 8 : index
    %c128_16 = arith.constant 128 : index
    %13 = vector.load %arg6[%c8, %c128_16] : memref<16x401xbf16, #tpu.memory_space<vmem>>, vector<8x256xbf16>
    tpu.vector_store %arg6[%c8, %c128_16], %12 {strides = array<i32>} : memref<16x401xbf16, #tpu.memory_space<vmem>>, vector<8x256xbf16>,
    %14 = tpu.iota {dimensions = array<i32: 1>} : vector<1x256xi32>
    %c16_i32 = arith.constant 16 : i32
    %c0_i32 = arith.constant 0 : i32
    %15 = arith.cmpi eq, %c16_i32, %c0_i32 : i32
    %c1_i32 = arith.constant 1 : i32
    %16 = arith.select %15, %c1_i32, %c16_i32 : i32
    %17 = vector.broadcast %16 : i32 to vector<1x256xi32>
    %18 = arith.remsi %14, %17 : vector<1x256xi32>
    %c0_i32_17 = arith.constant 0 : i32
    %19 = vector.broadcast %c0_i32_17 : i32 to vector<1x256xi32>
    %20 = arith.cmpi ne, %18, %19 : vector<1x256xi32>
    %c0_i32_18 = arith.constant 0 : i32
    %21 = vector.broadcast %c0_i32_18 : i32 to vector<1x256xi32>
    %22 = arith.cmpi slt, %18, %21 : vector<1x256xi32>
    %c0_i32_19 = arith.constant 0 : i32
    %23 = arith.cmpi slt, %16, %c0_i32_19 : i32
    %24 = vector.broadcast %23 : i1 to vector<1x256xi1>
    %25 = vector.broadcast %24 : vector<1x256xi1> to vector<1x256xi1>
    %26 = arith.xori %22, %25 : vector<1x256xi1>
    %27 = arith.andi %26, %20 : vector<1x256xi1>
    %28 = vector.broadcast %16 : i32 to vector<1x256xi32>
    %29 = arith.addi %18, %28 : vector<1x256xi32>
    %30 = arith.select %27, %29, %18 : vector<1x256xi1>, vector<1x256xi32>
    %c0_i32_20 = arith.constant 0 : i32
    %31 = vector.broadcast %c0_i32_20 : i32 to vector<1x256xi32>
    %32 = arith.cmpi ne, %30, %31 : vector<1x256xi32>
    %33 = arith.extui %32 : vector<1x256xi1> to vector<1x256xi32>
    %34 = arith.sitofp %33 : vector<1x256xi32> to vector<1x256xf32>
    %35 = arith.truncf %34 : vector<1x256xf32> to vector<1x256xbf16>
    %c15_i32 = arith.constant 15 : i32
    %36 = vector.broadcast %c15_i32 : i32 to vector<1x256xi32>
    %37 = arith.cmpi ne, %30, %36 : vector<1x256xi32>
    %38 = arith.extui %37 : vector<1x256xi1> to vector<1x256xi32>
    %39 = arith.sitofp %38 : vector<1x256xi32> to vector<1x256xf32>
    %40 = arith.truncf %39 : vector<1x256xf32> to vector<1x256xbf16>
    %cst_21 = arith.constant 0.000000e+00 : f32
    %41 = vector.broadcast %cst_21 : f32 to vector<16x256xf32>
    %c0_22 = arith.constant 0 : index
    %c111 = arith.constant 111 : index
    %42 = vector.load %arg6[%c0_22, %c111] : memref<16x401xbf16, #tpu.memory_space<vmem>>, vector<16x256xbf16>
    %43 = vector.broadcast %35 : vector<1x256xbf16> to vector<16x256xbf16>
    %44 = arith.mulf %42, %43 : vector<16x256xbf16>
    %c0_23 = arith.constant 0 : index
    %c112 = arith.constant 112 : index
    %45 = vector.load %arg6[%c0_23, %c112] : memref<16x401xbf16, #tpu.memory_space<vmem>>, vector<16x256xbf16>
    %c0_24 = arith.constant 0 : index
    %c113 = arith.constant 113 : index
    %46 = vector.load %arg6[%c0_24, %c113] : memref<16x401xbf16, #tpu.memory_space<vmem>>, vector<16x256xbf16>
    %47 = vector.broadcast %40 : vector<1x256xbf16> to vector<16x256xbf16>
    %48 = arith.mulf %46, %47 : vector<16x256xbf16>
    %49 = tpu.concatenate %44, %45, %48 in 0 : vector<16x256xbf16>, vector<16x256xbf16>, vector<16x256xbf16> -> vector<48x256xbf16>
    %c0_25 = arith.constant 0 : index
    %c0_26 = arith.constant 0 : index
    %50 = vector.load %arg3[%c0_25, %c0_26] : memref<16x144xbf16, #tpu.memory_space<vmem>>, vector<16x48xbf16>
    %cst_27 = arith.constant dense<0.000000e+00> : vector<16x256xf32>
    %51 = tpu.matmul %50, %49, %cst_27 {dimension_numbers = #tpu.dot_dimension_numbers<[1], [0], [0], [1], [0, 0, 1, 1], [], []>} : vector<16x48xbf16>, vector<48x256xbf16>, vector<16x256xf32> -> vector<16x256xf32>
    %52 = arith.addf %41, %51 : vector<16x256xf32>
    %c0_28 = arith.constant 0 : index
    %c127 = arith.constant 127 : index
    %53 = vector.load %arg6[%c0_28, %c127] : memref<16x401xbf16, #tpu.memory_space<vmem>>, vector<16x256xbf16>
    %54 = vector.broadcast %35 : vector<1x256xbf16> to vector<16x256xbf16>
    %55 = arith.mulf %53, %54 : vector<16x256xbf16>
    %c0_29 = arith.constant 0 : index
    %c128_30 = arith.constant 128 : index
    %56 = vector.load %arg6[%c0_29, %c128_30] : memref<16x401xbf16, #tpu.memory_space<vmem>>, vector<16x256xbf16>
    %c0_31 = arith.constant 0 : index
    %c129 = arith.constant 129 : index
    %57 = vector.load %arg6[%c0_31, %c129] : memref<16x401xbf16, #tpu.memory_space<vmem>>, vector<16x256xbf16>
    %58 = vector.broadcast %40 : vector<1x256xbf16> to vector<16x256xbf16>
    %59 = arith.mulf %57, %58 : vector<16x256xbf16>
    %60 = tpu.concatenate %55, %56, %59 in 0 : vector<16x256xbf16>, vector<16x256xbf16>, vector<16x256xbf16> -> vector<48x256xbf16>
    %c0_32 = arith.constant 0 : index
    %c48 = arith.constant 48 : index
    %61 = vector.load %arg3[%c0_32, %c48] : memref<16x144xbf16, #tpu.memory_space<vmem>>, vector<16x48xbf16>
    %cst_33 = arith.constant dense<0.000000e+00> : vector<16x256xf32>
    %62 = tpu.matmul %61, %60, %cst_33 {dimension_numbers = #tpu.dot_dimension_numbers<[1], [0], [0], [1], [0, 0, 1, 1], [], []>} : vector<16x48xbf16>, vector<48x256xbf16>, vector<16x256xf32> -> vector<16x256xf32>
    %63 = arith.addf %52, %62 : vector<16x256xf32>
    %c0_34 = arith.constant 0 : index
    %c143 = arith.constant 143 : index
    %64 = vector.load %arg6[%c0_34, %c143] : memref<16x401xbf16, #tpu.memory_space<vmem>>, vector<16x256xbf16>
    %65 = vector.broadcast %35 : vector<1x256xbf16> to vector<16x256xbf16>
    %66 = arith.mulf %64, %65 : vector<16x256xbf16>
    %c0_35 = arith.constant 0 : index
    %c144 = arith.constant 144 : index
    %67 = vector.load %arg6[%c0_35, %c144] : memref<16x401xbf16, #tpu.memory_space<vmem>>, vector<16x256xbf16>
    %c0_36 = arith.constant 0 : index
    %c145 = arith.constant 145 : index
    %68 = vector.load %arg6[%c0_36, %c145] : memref<16x401xbf16, #tpu.memory_space<vmem>>, vector<16x256xbf16>
    %69 = vector.broadcast %40 : vector<1x256xbf16> to vector<16x256xbf16>
    %70 = arith.mulf %68, %69 : vector<16x256xbf16>
    %71 = tpu.concatenate %66, %67, %70 in 0 : vector<16x256xbf16>, vector<16x256xbf16>, vector<16x256xbf16> -> vector<48x256xbf16>
    %c0_37 = arith.constant 0 : index
    %c96 = arith.constant 96 : index
    %72 = vector.load %arg3[%c0_37, %c96] : memref<16x144xbf16, #tpu.memory_space<vmem>>, vector<16x48xbf16>
    %cst_38 = arith.constant dense<0.000000e+00> : vector<16x256xf32>
    %73 = tpu.matmul %72, %71, %cst_38 {dimension_numbers = #tpu.dot_dimension_numbers<[1], [0], [0], [1], [0, 0, 1, 1], [], []>} : vector<16x48xbf16>, vector<48x256xbf16>, vector<16x256xf32> -> vector<16x256xf32>
    %74 = arith.addf %63, %73 : vector<16x256xf32>
    %cst_39 = arith.constant dense<0.000000e+00> : vector<16xf32>
    %75 = vector.multi_reduction <add>, %74, %cst_39 [1] : vector<16x256xf32> to vector<16xf32>
    %76 = vector.shape_cast %75 : vector<16xf32> to vector<16x1xf32>
    %cst_40 = arith.constant 2.560000e+02 : f32
    %77 = vector.broadcast %cst_40 : f32 to vector<16x1xf32>
    %78 = arith.divf %76, %77 : vector<16x1xf32>
    %79 = vector.broadcast %78 : vector<16x1xf32> to vector<16x256xf32>
    %80 = arith.subf %74, %79 : vector<16x256xf32>
    %81 = arith.mulf %80, %80 : vector<16x256xf32>
    %cst_41 = arith.constant dense<0.000000e+00> : vector<16xf32>
    %82 = vector.multi_reduction <add>, %81, %cst_41 [1] : vector<16x256xf32> to vector<16xf32>
    %83 = vector.shape_cast %82 : vector<16xf32> to vector<16x1xf32>
    %cst_42 = arith.constant 2.560000e+02 : f32
    %84 = vector.broadcast %cst_42 : f32 to vector<16x1xf32>
    %85 = arith.divf %83, %84 : vector<16x1xf32>
    %cst_43 = arith.constant 9.99999974E-6 : f32
    %86 = vector.broadcast %cst_43 : f32 to vector<16x1xf32>
    %87 = arith.addf %85, %86 : vector<16x1xf32>
    %88 = math.rsqrt %87 : vector<16x1xf32>
    %89 = vector.broadcast %88 : vector<16x1xf32> to vector<16x256xf32>
    %90 = arith.mulf %80, %89 : vector<16x256xf32>
    %cst_44 = arith.constant 0.000000e+00 : f32
    %91 = vector.broadcast %cst_44 : f32 to vector<16x256xf32>
    %92 = arith.maximumf %90, %91 : vector<16x256xf32>
    %93 = arith.truncf %92 : vector<16x256xf32> to vector<16x256xbf16>
    %c0_45 = arith.constant 0 : index
    %c128_46 = arith.constant 128 : index
    %94 = vector.load %arg7[%c0_45, %c128_46] : memref<16x401xbf16, #tpu.memory_space<vmem>>, vector<16x256xbf16>
    tpu.vector_store %arg7[%c0_45, %c128_46], %93 {strides = array<i32>} : memref<16x401xbf16, #tpu.memory_space<vmem>>, vector<16x256xbf16>,
    %cst_47 = arith.constant 0.000000e+00 : f32
    %95 = vector.broadcast %cst_47 : f32 to vector<16x256xf32>
    %c0_48 = arith.constant 0 : index
    %c111_49 = arith.constant 111 : index
    %96 = vector.load %arg7[%c0_48, %c111_49] : memref<16x401xbf16, #tpu.memory_space<vmem>>, vector<16x256xbf16>
    %97 = vector.broadcast %35 : vector<1x256xbf16> to vector<16x256xbf16>
    %98 = arith.mulf %96, %97 : vector<16x256xbf16>
    %c0_50 = arith.constant 0 : index
    %c112_51 = arith.constant 112 : index
    %99 = vector.load %arg7[%c0_50, %c112_51] : memref<16x401xbf16, #tpu.memory_space<vmem>>, vector<16x256xbf16>
    %c0_52 = arith.constant 0 : index
    %c113_53 = arith.constant 113 : index
    %100 = vector.load %arg7[%c0_52, %c113_53] : memref<16x401xbf16, #tpu.memory_space<vmem>>, vector<16x256xbf16>
    %101 = vector.broadcast %40 : vector<1x256xbf16> to vector<16x256xbf16>
    %102 = arith.mulf %100, %101 : vector<16x256xbf16>
    %103 = tpu.concatenate %98, %99, %102 in 0 : vector<16x256xbf16>, vector<16x256xbf16>, vector<16x256xbf16> -> vector<48x256xbf16>
    %c0_54 = arith.constant 0 : index
    %c0_55 = arith.constant 0 : index
    %104 = vector.load %arg4[%c0_54, %c0_55] : memref<16x144xbf16, #tpu.memory_space<vmem>>, vector<16x48xbf16>
    %cst_56 = arith.constant dense<0.000000e+00> : vector<16x256xf32>
    %105 = tpu.matmul %104, %103, %cst_56 {dimension_numbers = #tpu.dot_dimension_numbers<[1], [0], [0], [1], [0, 0, 1, 1], [], []>} : vector<16x48xbf16>, vector<48x256xbf16>, vector<16x256xf32> -> vector<16x256xf32>
    %106 = arith.addf %95, %105 : vector<16x256xf32>
    %c0_57 = arith.constant 0 : index
    %c127_58 = arith.constant 127 : index
    %107 = vector.load %arg7[%c0_57, %c127_58] : memref<16x401xbf16, #tpu.memory_space<vmem>>, vector<16x256xbf16>
    %108 = vector.broadcast %35 : vector<1x256xbf16> to vector<16x256xbf16>
    %109 = arith.mulf %107, %108 : vector<16x256xbf16>
    %c0_59 = arith.constant 0 : index
    %c128_60 = arith.constant 128 : index
    %110 = vector.load %arg7[%c0_59, %c128_60] : memref<16x401xbf16, #tpu.memory_space<vmem>>, vector<16x256xbf16>
    %c0_61 = arith.constant 0 : index
    %c129_62 = arith.constant 129 : index
    %111 = vector.load %arg7[%c0_61, %c129_62] : memref<16x401xbf16, #tpu.memory_space<vmem>>, vector<16x256xbf16>
    %112 = vector.broadcast %40 : vector<1x256xbf16> to vector<16x256xbf16>
    %113 = arith.mulf %111, %112 : vector<16x256xbf16>
    %114 = tpu.concatenate %109, %110, %113 in 0 : vector<16x256xbf16>, vector<16x256xbf16>, vector<16x256xbf16> -> vector<48x256xbf16>
    %c0_63 = arith.constant 0 : index
    %c48_64 = arith.constant 48 : index
    %115 = vector.load %arg4[%c0_63, %c48_64] : memref<16x144xbf16, #tpu.memory_space<vmem>>, vector<16x48xbf16>
    %cst_65 = arith.constant dense<0.000000e+00> : vector<16x256xf32>
    %116 = tpu.matmul %115, %114, %cst_65 {dimension_numbers = #tpu.dot_dimension_numbers<[1], [0], [0], [1], [0, 0, 1, 1], [], []>} : vector<16x48xbf16>, vector<48x256xbf16>, vector<16x256xf32> -> vector<16x256xf32>
    %117 = arith.addf %106, %116 : vector<16x256xf32>
    %c0_66 = arith.constant 0 : index
    %c143_67 = arith.constant 143 : index
    %118 = vector.load %arg7[%c0_66, %c143_67] : memref<16x401xbf16, #tpu.memory_space<vmem>>, vector<16x256xbf16>
    %119 = vector.broadcast %35 : vector<1x256xbf16> to vector<16x256xbf16>
    %120 = arith.mulf %118, %119 : vector<16x256xbf16>
    %c0_68 = arith.constant 0 : index
    %c144_69 = arith.constant 144 : index
    %121 = vector.load %arg7[%c0_68, %c144_69] : memref<16x401xbf16, #tpu.memory_space<vmem>>, vector<16x256xbf16>
    %c0_70 = arith.constant 0 : index
    %c145_71 = arith.constant 145 : index
    %122 = vector.load %arg7[%c0_70, %c145_71] : memref<16x401xbf16, #tpu.memory_space<vmem>>, vector<16x256xbf16>
    %123 = vector.broadcast %40 : vector<1x256xbf16> to vector<16x256xbf16>
    %124 = arith.mulf %122, %123 : vector<16x256xbf16>
    %125 = tpu.concatenate %120, %121, %124 in 0 : vector<16x256xbf16>, vector<16x256xbf16>, vector<16x256xbf16> -> vector<48x256xbf16>
    %c0_72 = arith.constant 0 : index
    %c96_73 = arith.constant 96 : index
    %126 = vector.load %arg4[%c0_72, %c96_73] : memref<16x144xbf16, #tpu.memory_space<vmem>>, vector<16x48xbf16>
    %cst_74 = arith.constant dense<0.000000e+00> : vector<16x256xf32>
    %127 = tpu.matmul %126, %125, %cst_74 {dimension_numbers = #tpu.dot_dimension_numbers<[1], [0], [0], [1], [0, 0, 1, 1], [], []>} : vector<16x48xbf16>, vector<48x256xbf16>, vector<16x256xf32> -> vector<16x256xf32>
    %128 = arith.addf %117, %127 : vector<16x256xf32>
    %cst_75 = arith.constant dense<0.000000e+00> : vector<16xf32>
    %129 = vector.multi_reduction <add>, %128, %cst_75 [1] : vector<16x256xf32> to vector<16xf32>
    %130 = vector.shape_cast %129 : vector<16xf32> to vector<16x1xf32>
    %cst_76 = arith.constant 2.560000e+02 : f32
    %131 = vector.broadcast %cst_76 : f32 to vector<16x1xf32>
    %132 = arith.divf %130, %131 : vector<16x1xf32>
    %133 = vector.broadcast %132 : vector<16x1xf32> to vector<16x256xf32>
    %134 = arith.subf %128, %133 : vector<16x256xf32>
    %135 = arith.mulf %134, %134 : vector<16x256xf32>
    %cst_77 = arith.constant dense<0.000000e+00> : vector<16xf32>
    %136 = vector.multi_reduction <add>, %135, %cst_77 [1] : vector<16x256xf32> to vector<16xf32>
    %137 = vector.shape_cast %136 : vector<16xf32> to vector<16x1xf32>
    %cst_78 = arith.constant 2.560000e+02 : f32
    %138 = vector.broadcast %cst_78 : f32 to vector<16x1xf32>
    %139 = arith.divf %137, %138 : vector<16x1xf32>
    %cst_79 = arith.constant 9.99999974E-6 : f32
    %140 = vector.broadcast %cst_79 : f32 to vector<16x1xf32>
    %141 = arith.addf %139, %140 : vector<16x1xf32>
    %142 = math.rsqrt %141 : vector<16x1xf32>
    %143 = vector.broadcast %142 : vector<16x1xf32> to vector<16x256xf32>
    %144 = arith.mulf %134, %143 : vector<16x256xf32>
    %cst_80 = arith.constant 0.000000e+00 : f32
    %145 = vector.broadcast %cst_80 : f32 to vector<16x256xf32>
    %146 = arith.maximumf %144, %145 : vector<16x256xf32>
    %147 = arith.truncf %146 : vector<16x256xf32> to vector<16x256xbf16>
    %c0_81 = arith.constant 0 : index
    %c0_82 = arith.constant 0 : index
    %c0_83 = arith.constant 0 : index
    %148 = vector.load %arg5[%c0_81, %c0_82, %c0_83] : memref<1x16x256xbf16, #tpu.memory_space<vmem>>, vector<1x16x256xbf16>
    %149 = vector.shape_cast %148 : vector<1x16x256xbf16> to vector<16x256xbf16>
    %150 = vector.shape_cast %147 : vector<16x256xbf16> to vector<1x16x256xbf16>
    tpu.vector_store %arg5[%c0_81, %c0_82, %c0_83], %150 {strides = array<i32>} : memref<1x16x256xbf16, #tpu.memory_space<vmem>>, vector<1x16x256xbf16>,
    return
  }
  func.func @transform_0(%arg0: i32) -> (i32, i32, i32) {
    %c0_i32 = arith.constant 0 : i32
    %c0_i32_0 = arith.constant 0 : i32
    %c0_i32_1 = arith.constant 0 : i32
    return %arg0, %c0_i32, %c0_i32_0 : i32, i32, i32
  }
  func.func @transform_1(%arg0: i32) -> (i32, i32, i32) {
    %c0_i32 = arith.constant 0 : i32
    %c0_i32_0 = arith.constant 0 : i32
    %c0_i32_1 = arith.constant 0 : i32
    return %arg0, %c0_i32, %c0_i32_0 : i32, i32, i32
  }
  func.func @transform_2(%arg0: i32) -> (i32, i32) {
    %c0_i32 = arith.constant 0 : i32
    %c0_i32_0 = arith.constant 0 : i32
    %c0_i32_1 = arith.constant 0 : i32
    return %c0_i32, %c0_i32_0 : i32, i32
  }
  func.func @transform_3(%arg0: i32) -> (i32, i32) {
    %c0_i32 = arith.constant 0 : i32
    %c0_i32_0 = arith.constant 0 : i32
    %c0_i32_1 = arith.constant 0 : i32
    return %c0_i32, %c0_i32_0 : i32, i32
  }
  func.func @transform_4(%arg0: i32) -> (i32, i32, i32) {
    %c0_i32 = arith.constant 0 : i32
    %c0_i32_0 = arith.constant 0 : i32
    %c0_i32_1 = arith.constant 0 : i32
    return %arg0, %c0_i32, %c0_i32_0 : i32, i32, i32
  }
}

</mosaic_0001>

<llo_original>
// kernel: up_forward.1
$region0: #{up_forward.1}
  #allocation0 [shape = 'u32[]', space=smem, size = 0x4, offset = 0x4, fixed_abs, tag = 'smem constant byte address 0x4 - core index']
  #allocation1 [shape = 'u32[144,128]{1,0:T(1,128)}', space=vmem, size = 0x12000, scoped, tag = 'internal scratch']
  #allocation2 [shape = 'bf16[16,401]{1,0:T(8,128)(2,1)}', space=vmem, size = 0x4000, scoped, tag = 'scratch operand']
  #allocation3 [shape = 'bf16[16,401]{1,0:T(8,128)(2,1)}', space=vmem, size = 0x4000, scoped, tag = 'scratch operand']
  %s0 = inlined_call_operand.vmem [shape: bf16[2,8,256], index: 0, kind: input, shape index: {}]
  %s1 = inlined_call_operand.vmem [shape: bf16[2,8,256], index: 1, kind: input, shape index: {}]
  %s2 = inlined_call_operand.vmem [shape: bf16[16,144], index: 2, kind: input, shape index: {}]
  %s3 = inlined_call_operand.vmem [shape: bf16[16,144], index: 3, kind: input, shape index: {}]
  %s4 = inlined_call_operand.vmem [shape: bf16[2,16,256], index: 4, kind: output, shape index: {}]
  %s5 = sld [smem:[#allocation0]]
  $region49: #{up_forward.1} parent=0
    _
  %s7 = ssub.s32 1, %s5
  %s8 = scalar_select 0, %s7, %s5
  loop: start=0, step=1, limit=4
  $region2: #{up_forward.1} parent=0 // loop_pre_header
    _
  $region3: #{up_forward.1} parent=0 // loop_header
    %s10 = sphi 0, %s14
    %p11 = scmp.ge.s32.totalorder %s10, 4
    %s20 = sphi 0, %s22
    %s23 = sphi 0, %s20
    %s24 = sphi 0, %s23
    %s40 = sphi 0, %s24
    %s46 = sphi 0, %s48
    %s49 = sphi 0, %s46
    %s50 = sphi 0, %s49
    %s66 = sphi 0, %s50
    %s70 = sphi 0, %s70
    %s72 = sphi 0, %s70
    %s73 = sphi 0, %s72
    %s87 = sphi 0, %s73
    %s91 = sphi 0, %s91
    %s93 = sphi 0, %s91
    %s94 = sphi 0, %s93
    %s108 = sphi 0, %s94
    %s114 = sphi 0, %s116
    %s117 = sphi 0, %s114
    %s118 = sphi 0, %s117
    %s134 = sphi 0, %s118
  $region4: #{up_forward.1} parent=0 // loop_header_branch
    %13 = sbr.rel (%p11) target = $region8
  $region5: #{up_forward.1} parent=0 // loop_body
    %s15 = ssub.s32 %s10, 1
    %s16 = ssub.s32 %s10, 2
    %s17 = sadd.s32 %s10, 1
    %s18 = ssub.s32 %s10, %s17
    %p19 = scmp.eq.s32.totalorder %s18, 0
    %s21 = sadd.s32 %s20, 1
    %s22 = scalar_select %p19, %s20, %s21
    %p25 = pneg %p19
    %p26 = scmp.eq.s32.totalorder %s10, 1
    %p27 = por %p25, %p26
    %p28 = scmp.ne.s32.totalorder %s20, %s23
    %p29 = scmp.eq.s32.totalorder %s10, 0
    %p30 = por %p28, %p29
    %p31 = scmp.ne.s32.totalorder %s20, %s23
    %p32 = scmp.eq.s32.totalorder %s15, 1
    %p33 = por %p31, %p32
    %p34 = scmp.ne.s32.totalorder %s23, %s24
    %p35 = scmp.eq.s32.totalorder %s15, 0
    %p36 = por %p34, %p35
    %p37 = scmp.ne.s32.totalorder %s23, %s24
    %p38 = scmp.eq.s32.totalorder %s16, 1
    %p39 = por %p37, %p38
    %p41 = scmp.ne.s32.totalorder %s24, %s40
    %p42 = scmp.eq.s32.totalorder %s16, 0
    %p43 = por %p41, %p42
    %s44 = ssub.s32 %s10, %s17
    %p45 = scmp.eq.s32.totalorder %s44, 0
    %s47 = sadd.s32 %s46, 1
    %s48 = scalar_select %p45, %s46, %s47
    %p51 = pneg %p45
    %p52 = scmp.eq.s32.totalorder %s10, 1
    %p53 = por %p51, %p52
    %p54 = scmp.ne.s32.totalorder %s46, %s49
    %p55 = scmp.eq.s32.totalorder %s10, 0
    %p56 = por %p54, %p55
    %p57 = scmp.ne.s32.totalorder %s46, %s49
    %p58 = scmp.eq.s32.totalorder %s15, 1
    %p59 = por %p57, %p58
    %p60 = scmp.ne.s32.totalorder %s49, %s50
    %p61 = scmp.eq.s32.totalorder %s15, 0
    %p62 = por %p60, %p61
    %p63 = scmp.ne.s32.totalorder %s49, %s50
    %p64 = scmp.eq.s32.totalorder %s16, 1
    %p65 = por %p63, %p64
    %p67 = scmp.ne.s32.totalorder %s50, %s66
    %p68 = scmp.eq.s32.totalorder %s16, 0
    %p69 = por %p67, %p68
    %s71 = sadd.s32 %s70, 1
    %p74 = scmp.eq.s32.totalorder %s10, 1
    %p75 = scmp.ne.s32.totalorder %s70, %s72
    %p76 = scmp.eq.s32.totalorder %s10, 0
    %p77 = por %p75, %p76
    %p78 = scmp.ne.s32.totalorder %s70, %s72
    %p79 = scmp.eq.s32.totalorder %s15, 1
    %p80 = por %p78, %p79
    %p81 = scmp.ne.s32.totalorder %s72, %s73
    %p82 = scmp.eq.s32.totalorder %s15, 0
    %p83 = por %p81, %p82
    %p84 = scmp.ne.s32.totalorder %s72, %s73
    %p85 = scmp.eq.s32.totalorder %s16, 1
    %p86 = por %p84, %p85
    %p88 = scmp.ne.s32.totalorder %s73, %s87
    %p89 = scmp.eq.s32.totalorder %s16, 0
    %p90 = por %p88, %p89
    %s92 = sadd.s32 %s91, 1
    %p95 = scmp.eq.s32.totalorder %s10, 1
    %p96 = scmp.ne.s32.totalorder %s91, %s93
    %p97 = scmp.eq.s32.totalorder %s10, 0
    %p98 = por %p96, %p97
    %p99 = scmp.ne.s32.totalorder %s91, %s93
    %p100 = scmp.eq.s32.totalorder %s15, 1
    %p101 = por %p99, %p100
    %p102 = scmp.ne.s32.totalorder %s93, %s94
    %p103 = scmp.eq.s32.totalorder %s15, 0
    %p104 = por %p102, %p103
    %p105 = scmp.ne.s32.totalorder %s93, %s94
    %p106 = scmp.eq.s32.totalorder %s16, 1
    %p107 = por %p105, %p106
    %p109 = scmp.ne.s32.totalorder %s94, %s108
    %p110 = scmp.eq.s32.totalorder %s16, 0
    %p111 = por %p109, %p110
    %s112 = ssub.s32 %s10, %s17
    %p113 = scmp.eq.s32.totalorder %s112, 0
    %s115 = sadd.s32 %s114, 1
    %s116 = scalar_select %p113, %s114, %s115
    %p119 = pneg %p113
    %p120 = scmp.eq.s32.totalorder %s10, 1
    %p121 = por %p119, %p120
    %p122 = scmp.ne.s32.totalorder %s114, %s117
    %p123 = scmp.eq.s32.totalorder %s10, 0
    %p124 = por %p122, %p123
    %p125 = scmp.ne.s32.totalorder %s114, %s117
    %p126 = scmp.eq.s32.totalorder %s15, 1
    %p127 = por %p125, %p126
    %p128 = scmp.ne.s32.totalorder %s117, %s118
    %p129 = scmp.eq.s32.totalorder %s15, 0
    %p130 = por %p128, %p129
    %p131 = scmp.ne.s32.totalorder %s117, %s118
    %p132 = scmp.eq.s32.totalorder %s16, 1
    %p133 = por %p131, %p132
    %p135 = scmp.ne.s32.totalorder %s118, %s134
    %p136 = scmp.eq.s32.totalorder %s16, 0
    %p137 = por %p135, %p136
    %p138 = scmp.le.s32.totalorder 1, %s10
    %p139 = scmp.lt.s32.totalorder %s10, 3
    %p140 = pnand %p138, %p139
    %p141 = pneg %p140
    // Predicated region
    $region9: #{up_forward.1} parent=5 // pred_check
      _
    $region10: #{up_forward.1} parent=5 // pred_check_branch
      %143 = sbr.rel (%p140) target = $region12
    $region11: #{up_forward.1} parent=5 // pred_region
      %s144 = ssub.s32 %s10, 1
      // Predicated region
      $region13: #{up_forward.1} parent=11 // pred_check
        %p145 = pneg %p83
      $region14: #{up_forward.1} parent=11 // pred_check_branch
        %147 = sbr.rel (%p145) target = $region16
      $region15: #{up_forward.1} parent=11 // pred_region
        _
      $region16: #{up_forward.1} parent=11 // pred_fallthru
        _
      // Predicated region
      $region17: #{up_forward.1} parent=11 // pred_check
        %p148 = pneg %p104
      $region18: #{up_forward.1} parent=11 // pred_check_branch
        %150 = sbr.rel (%p148) target = $region20
      $region19: #{up_forward.1} parent=11 // pred_region
        _
      $region20: #{up_forward.1} parent=11 // pred_fallthru
        _
    $region12: #{up_forward.1} parent=5 // pred_fallthru
      _
    %p151 = scmp.lt.s32.totalorder %s10, 2
    // Predicated region
    $region21: #{up_forward.1} parent=5 // pred_check
      %p152 = pneg %p151
    $region22: #{up_forward.1} parent=5 // pred_check_branch
      %154 = sbr.rel (%p152) target = $region24
    $region23: #{up_forward.1} parent=5 // pred_region
      // Predicated region
      $region25: #{up_forward.1} parent=23 // pred_check
        %p155 = pneg %p30
      $region26: #{up_forward.1} parent=23 // pred_check_branch
        %157 = sbr.rel (%p155) target = $region28
      $region27: #{up_forward.1} parent=23 // pred_region
        %p158 = scmp.lt.s32.totalorder %s10, 1
        %s159 = scalar_select %p158, %s10, 1
        %s160 = smul.addr %s159, 2
        %s161 = smul.addr %s160, 4
        %s162 = scalar_lea.vmem %s0, %s161
      $region28: #{up_forward.1} parent=23 // pred_fallthru
        _
      // Predicated region
      $region29: #{up_forward.1} parent=23 // pred_check
        %p163 = pneg %p56
      $region30: #{up_forward.1} parent=23 // pred_check_branch
        %165 = sbr.rel (%p163) target = $region32
      $region31: #{up_forward.1} parent=23 // pred_region
        %p166 = scmp.lt.s32.totalorder %s10, 1
        %s167 = scalar_select %p166, %s10, 1
        %s168 = smul.addr %s167, 2
        %s169 = smul.addr %s168, 4
        %s170 = scalar_lea.vmem %s1, %s169
      $region32: #{up_forward.1} parent=23 // pred_fallthru
        _
    $region24: #{up_forward.1} parent=5 // pred_fallthru
      _
    %p171 = scmp.le.s32.totalorder 1, %s10
    %p172 = scmp.lt.s32.totalorder %s10, 3
    %p173 = pnand %p171, %p172
    %p174 = pneg %p173
    // Predicated region
    $region33: #{up_forward.1} parent=5 // pred_check
      _
    $region34: #{up_forward.1} parent=5 // pred_check_branch
      %176 = sbr.rel (%p173) target = $region36
    $region35: #{up_forward.1} parent=5 // pred_region
      %s177 = ssub.s32 %s10, 1
      %p178 = scmp.lt.s32.totalorder %s15, 1
      %s179 = scalar_select %p178, %s15, 1
      %s180 = smul.addr %s179, 2
      %s181 = smul.addr %s180, 4
      %s182 = scalar_lea.vmem %s0, %s181
      %p183 = pneg %p36
      %p184 = pneg %p33
      %p185 = scmp.lt.s32.totalorder %s15, 1
      %s186 = scalar_select %p185, %s15, 1
      %s187 = smul.addr %s186, 2
      %s188 = smul.addr %s187, 4
      %s189 = scalar_lea.vmem %s1, %s188
      %p190 = pneg %p62
      %p191 = pneg %p59
      %p192 = pneg %p83
      %p193 = pneg %p80
      %p194 = pneg %p104
      %p195 = pneg %p101
      %p196 = pneg %p130
      %p197 = pneg %p127
      %p198 = scmp.lt.s32.totalorder %s15, 1
      %s199 = scalar_select %p198, %s15, 1
      %s200 = smul.addr %s199, 4
      %s201 = smul.addr %s200, 4
      %s202 = scalar_lea.vmem %s4, %s201
      %p203 = scmp.lt.s32.totalorder %s15, 1
      %s204 = scalar_select %p203, %s15, 1
      %s205 = smul.addr %s204, 2
      %s206 = smul.addr %s205, 4
      %s207 = scalar_lea.vmem %s0, %s206
      %p208 = scmp.lt.s32.totalorder %s15, 1
      %s209 = scalar_select %p208, %s15, 1
      %s210 = smul.addr %s209, 2
      %s211 = smul.addr %s210, 4
      %s212 = scalar_lea.vmem %s1, %s211
      %p213 = scmp.lt.s32.totalorder %s15, 1
      %s214 = scalar_select %p213, %s15, 1
      %s215 = smul.addr %s214, 4
      %s216 = smul.addr %s215, 4
      %s217 = scalar_lea.vmem %s4, %s216
      %219 = vst [vmem:[#allocation2] sm:$0xf] 0
      %220 = vst [vmem:[#allocation2 + $0x10] sm:$0xf] 0
      %vm221 = vcmask 134144
      %222 = vst.msk [vmem:[#allocation2 + $0xc] sm:$0xf] %vm221, 0
      %223 = vst.msk [vmem:[#allocation2 + $0x1c] sm:$0xf] %vm221, 0
      %224 = vst [vmem:[#allocation3] sm:$0xf] 0
      %225 = vst [vmem:[#allocation3 + $0x10] sm:$0xf] 0
      %226 = vst.msk [vmem:[#allocation3 + $0xc] sm:$0xf] %vm221, 0
      %227 = vst.msk [vmem:[#allocation3 + $0x1c] sm:$0xf] %vm221, 0
      %v228 = vld [vmem:[%s207] sm:$0xff]
      %229 = vst [vmem:[#allocation2 + $0x4] sm:$0xff] %v228
      %v230 = vld [vmem:[%s212] sm:$0xff]
      %231 = vst [vmem:[#allocation2 + $0x14] sm:$0xff] %v230
      %v232 = vlaneseq
      %v233 = vand.u32 %v232, 127
      %v234 = vadd.s32 %v233, 128
      %vm235 = vcmp.lt.s32.totalorder %v233, 0
      %v236 = vsub.s32 0, %v233
      %v237 = vsel %vm235, %v236, %v233
      %v238 = vshrl.u32 %v237, 4
      %v239 = vand.u32 %v237, 15
      %v240 = vsub.s32 0, %v239
      %v241 = vsel %vm235, %v240, %v239
      %vm242 = vcmp.lt.s32.totalorder %v234, 0
      %v243 = vsub.s32 0, %v234
      %v244 = vsel %vm242, %v243, %v234
      %v245 = vshrl.u32 %v244, 4
      %v246 = vand.u32 %v244, 15
      %v247 = vsub.s32 0, %v246
      %v248 = vsel %vm242, %v247, %v246
      %vm249 = vcmp.ne.s32.totalorder %v241, 0
      %vm250 = vcmp.ne.s32.totalorder %v248, 0
      %vm251 = vcmp.lt.s32.totalorder %v241, 0
      %vm252 = vcmp.lt.s32.totalorder %v248, 0
      %vm253 = vmand %vm251, %vm249
      %vm254 = vmand %vm252, %vm250
      %v255 = vadd.s32 %v241, 16
      %v256 = vadd.s32 %v248, 16
      %v257 = vsel %vm253, %v255, %v241
      %v258 = vsel %vm254, %v256, %v248
      %vm259 = vcmp.ne.s32.totalorder %v257, 0
      %vm260 = vcmp.ne.s32.totalorder %v258, 0
      %v261 = vsel %vm259, 1, 0
      %v262 = vsel %vm260, 1, 0
      %v263 = vcvt.s32.f32 %v261
      %v264 = vcvt.s32.f32 %v262
      %v265 = vpack.c.bf16 %v263, %v263
      %v266 = vpack.c.bf16 %v264, %v264
      %vm267 = vcmp.ne.s32.totalorder %v257, 15
      %vm268 = vcmp.ne.s32.totalorder %v258, 15
      %v269 = vsel %vm267, 1, 0
      %v270 = vsel %vm268, 1, 0
      %v271 = vcvt.s32.f32 %v269
      %v272 = vcvt.s32.f32 %v270
      %v273 = vpack.c.bf16 %v271, %v271
      %v274 = vpack.c.bf16 %v272, %v272
      %v275 = vld [vmem:[#allocation2] sm:$0xff]
      %v276 = vld [vmem:[#allocation2 + $0x8] sm:$0xf]
      %v277 = vld [vmem:[#allocation2 + $0x10] sm:$0xff]
      %v278 = vld [vmem:[#allocation2 + $0x18] sm:$0xf]
      %v281 = vunpack.c.l.b16 %v265
      %v282 = vunpack.c.l.b16 %v266
      %v283 = vpack.c.b16 %v282, %v281
      %284 = vrot.lane.b32.xlu0 %v283, 111
      %v285 = vpop.permute.xlu0 %284
      %v286 = vrot.slane %v285, 4
      %vm287 = vcmask 908288
      %v288 = vsel %vm287, %v286, %v285
      %v291 = vmul.bf16 %v275, %v288
      %v292 = vmul.bf16 %v276, %v286
      %v293 = vmul.bf16 %v277, %v288
      %v294 = vmul.bf16 %v278, %v286
      %v297 = vunpack.c.l.b16 %v273
      %v298 = vunpack.c.l.b16 %v274
      %v299 = vpack.c.b16 %v298, %v297
      %300 = vrot.lane.b32.xlu0 %v299, 113
      %v301 = vpop.permute.xlu0 %300
      %v302 = vrot.slane %v301, 4
      %vm303 = vcmask 924672
      %v304 = vsel %vm303, %v302, %v301
      %v307 = vmul.bf16 %v275, %v304
      %v308 = vmul.bf16 %v276, %v302
      %v309 = vmul.bf16 %v277, %v304
      %v310 = vmul.bf16 %v278, %v302
      %v315 = vunpack.c.l.b16 %v291
      %v316 = vunpack.c.h.b16 %v291
      %v317 = vunpack.c.l.b16 %v292
      %v318 = vunpack.c.l.b16 %v293
      %v319 = vunpack.c.h.b16 %v293
      %v320 = vunpack.c.l.b16 %v294
      %v321 = vpack.c.b16 %v318, %v315
      %v322 = vpack.c.b16 %v319, %v316
      %v323 = vpack.c.b16 %v320, %v317
      %v328 = vunpack.c.l.b16 %v275
      %v329 = vunpack.c.h.b16 %v275
      %v330 = vunpack.c.l.b16 %v276
      %v331 = vunpack.c.l.b16 %v277
      %v332 = vunpack.c.h.b16 %v277
      %v333 = vunpack.c.l.b16 %v278
      %v334 = vpack.c.b16 %v331, %v328
      %v335 = vpack.c.b16 %v332, %v329
      %v336 = vpack.c.b16 %v333, %v330
      %337 = vrot.lane.b32.xlu0 %v334, 127
      %v338 = vpop.permute.xlu0 %337
      %339 = vrot.lane.b32.xlu0 %v335, 127
      %v340 = vpop.permute.xlu0 %339
      %341 = vrot.lane.b32.xlu0 %v336, 127
      %v342 = vpop.permute.xlu0 %341
      %vm343 = vcmask 1039360
      %v344 = vsel %vm343, %v338, %v340
      %v345 = vsel %vm343, %v340, %v342
      %v350 = vunpack.c.l.b16 %v307
      %v351 = vunpack.c.h.b16 %v307
      %v352 = vunpack.c.l.b16 %v308
      %v353 = vunpack.c.l.b16 %v309
      %v354 = vunpack.c.h.b16 %v309
      %v355 = vunpack.c.l.b16 %v310
      %v356 = vpack.c.b16 %v353, %v350
      %v357 = vpack.c.b16 %v354, %v351
      %v358 = vpack.c.b16 %v355, %v352
      %359 = vrot.lane.b32.xlu0 %v356, 126
      %v360 = vpop.permute.xlu0 %359
      %361 = vrot.lane.b32.xlu0 %v357, 126
      %v362 = vpop.permute.xlu0 %361
      %363 = vrot.lane.b32.xlu0 %v358, 126
      %v364 = vpop.permute.xlu0 %363
      %vm365 = vcmask 1031168
      %v366 = vsel %vm365, %v360, %v362
      %v367 = vsel %vm365, %v362, %v364
      %v368 = vld [vmem:[%s2] sm:$0xf]
      %v369 = vld [vmem:[%s2 + $0x8] sm:$0xf]
      %370 = vrot.lane.b32.xlu0 %v283, 127
      %v371 = vpop.permute.xlu0 %370
      %v372 = vrot.slane %v371, 4
      %v373 = vsel %vm343, %v372, %v371
      %v376 = vmul.bf16 %v275, %v373
      %v377 = vmul.bf16 %v276, %v372
      %v378 = vmul.bf16 %v277, %v373
      %v379 = vmul.bf16 %v278, %v372
      %v380 = vld [vmem:[#allocation2 + $0x4] sm:$0xff]
      %v381 = vld [vmem:[#allocation2 + $0x14] sm:$0xff]
      %v382 = vld [vmem:[#allocation2 + $0xc] sm:$0xf]
      %v383 = vld [vmem:[#allocation2 + $0x1c] sm:$0xf]
      %384 = vrot.lane.b32.xlu0 %v299, 1
      %v385 = vpop.permute.xlu0 %384
      %v386 = vrot.slane %v385, 4
      %vm387 = vcmask 7168
      %v388 = vsel %vm387, %v386, %v385
      %v391 = vmul.bf16 %v380, %v388
      %v392 = vmul.bf16 %v382, %v386
      %v393 = vmul.bf16 %v381, %v388
      %v394 = vmul.bf16 %v383, %v386
      %v399 = vunpack.c.l.b16 %v376
      %v400 = vunpack.c.h.b16 %v376
      %v401 = vunpack.c.l.b16 %v377
      %v402 = vunpack.c.l.b16 %v378
      %v403 = vunpack.c.h.b16 %v378
      %v404 = vunpack.c.l.b16 %v379
      %v405 = vpack.c.b16 %v402, %v399
      %v406 = vpack.c.b16 %v403, %v400
      %v407 = vpack.c.b16 %v404, %v401
      %v410 = vunpack.c.l.b16 %v380
      %v411 = vunpack.c.h.b16 %v380
      %v412 = vunpack.c.l.b16 %v381
      %v413 = vunpack.c.h.b16 %v381
      %v414 = vpack.c.b16 %v412, %v410
      %v415 = vpack.c.b16 %v413, %v411
      %416 = vrot.lane.b32.xlu0 %v414, 127
      %v417 = vpop.permute.xlu0 %416
      %418 = vrot.lane.b32.xlu0 %v415, 127
      %v419 = vpop.permute.xlu0 %418
      %v420 = vsel %vm343, %v417, %v419
      %v425 = vunpack.c.l.b16 %v391
      %v426 = vunpack.c.h.b16 %v391
      %v427 = vunpack.c.l.b16 %v392
      %v428 = vunpack.c.l.b16 %v393
      %v429 = vunpack.c.h.b16 %v393
      %v430 = vunpack.c.l.b16 %v394
      %v431 = vpack.c.b16 %v428, %v425
      %v432 = vpack.c.b16 %v429, %v426
      %v433 = vpack.c.b16 %v430, %v427
      %434 = vrot.lane.b32.xlu0 %v431, 126
      %v435 = vpop.permute.xlu0 %434
      %436 = vrot.lane.b32.xlu0 %v432, 126
      %v437 = vpop.permute.xlu0 %436
      %438 = vrot.lane.b32.xlu0 %v433, 126
      %v439 = vpop.permute.xlu0 %438
      %v440 = vsel %vm365, %v435, %v437
      %v441 = vsel %vm365, %v437, %v439
      %v444 = vunpack.c.l.b16 %v368
      %v445 = vunpack.c.l.b16 %v369
      %v446 = vpack.c.b16 %v445, %v444
      %447 = vrot.lane.b32.xlu0 %v446, 80
      %v448 = vpop.permute.xlu0 %447
      %449 = vrot.lane.b32.xlu0 %v405, 1
      %v450 = vpop.permute.xlu0 %449
      %451 = vrot.lane.b32.xlu0 %v406, 1
      %v452 = vpop.permute.xlu0 %451
      %453 = vrot.lane.b32.xlu0 %v407, 1
      %v454 = vpop.permute.xlu0 %453
      %455 = vrot.lane.b32.xlu0 %v417, 1
      %v456 = vpop.permute.xlu0 %455
      %457 = vrot.lane.b32.xlu0 %v420, 1
      %v458 = vpop.permute.xlu0 %457
      %459 = vrot.lane.b32.xlu0 %v419, 1
      %v460 = vpop.permute.xlu0 %459
      %461 = vrot.lane.b32.xlu0 %v435, 1
      %v462 = vpop.permute.xlu0 %461
      %463 = vrot.lane.b32.xlu0 %v440, 1
      %v464 = vpop.permute.xlu0 %463
      %465 = vrot.lane.b32.xlu0 %v441, 1
      %v466 = vpop.permute.xlu0 %465
      %v467 = vsel %vm387, %v450, %v452
      %v468 = vsel %vm387, %v452, %v454
      %v469 = vsel %vm387, %v456, %v458
      %v470 = vsel %vm387, %v458, %v460
      %v471 = vsel %vm387, %v462, %v464
      %v472 = vsel %vm387, %v464, %v466
      %vm479 = vcmask 392192
      %v481 = vsel %vm479, %v448, 0
      %483 = vmatprep.subr.bf16.mxu0 0
      %484 = vmatpush1.bf16.msra.mxu0 0
      %485 = vmatprep.subr.bf16.mxu0 0
      %486 = vmatpush1.bf16.msra.mxu0 0
      %487 = vmatprep.subr.bf16.mxu0 0
      %488 = vmatpush1.bf16.msra.mxu0 0
      %489 = vmatprep.subr.bf16.mxu0 0
      %490 = vmatpush1.bf16.msra.mxu0 0
      %491 = vmatprep.subr.bf16.mxu0 0
      %492 = vmatpush1.bf16.msra.mxu0 0
      %493 = vmatprep.subr.bf16.mxu0 %v472
      %494 = vmatpush1.bf16.msra.mxu0 %v471
      %495 = vmatprep.subr.bf16.mxu0 %v470
      %496 = vmatpush1.bf16.msra.mxu0 %v469
      %497 = vmatprep.subr.bf16.mxu0 %v468
      %498 = vmatpush1.bf16.msra.mxu0 %v467
      %499 = vmatprep.subr.bf16.mxu0 0
      %500 = vmatpush2.bf16.msra.mxu0 0
      %501 = vmatprep.subr.bf16.mxu0 0
      %502 = vmatpush2.bf16.msra.mxu0 0
      %503 = vmatprep.subr.bf16.mxu0 0
      %504 = vmatpush2.bf16.msra.mxu0 0
      %505 = vmatprep.subr.bf16.mxu0 0
      %506 = vmatpush2.bf16.msra.mxu0 0
      %507 = vmatprep.subr.bf16.mxu0 0
      %508 = vmatpush2.bf16.msra.mxu0 0
      %509 = vmatprep.subr.bf16.mxu0 0
      %510 = vmatpush2.bf16.msra.mxu0 0
      %511 = vmatprep.subr.bf16.mxu0 0
      %512 = vmatpush2.bf16.msra.mxu0 0
      %513 = vmatprep.subr.bf16.mxu0 0
      %514 = vmatpush2.bf16.msra.mxu0 0
      %515 = vmatprep.mubr.bf16.mxu0 0
      %516 = vmatmul.mubr.bf16.gmra.mxu0 %v481
      %v517 = vpop.f32.mrf.mxu0
      %v518 = vadd.f32 0.0, %v517
      %v519 = vpop.f32.mrf.mxu0
      %v520 = vadd.f32 0.0, %v519
      %v521 = vpop.f32.mrf.mxu0
      %v522 = vadd.f32 0.0, %v521
      %v523 = vpop.f32.mrf.mxu0
      %v524 = vadd.f32 0.0, %v523
      %525 = vdwg.mxu0
      %526 = vrot.lane.b32.xlu0 %v321, 17
      %v527 = vpop.permute.xlu0 %526
      %528 = vrot.lane.b32.xlu0 %v322, 17
      %v529 = vpop.permute.xlu0 %528
      %530 = vrot.lane.b32.xlu0 %v323, 17
      %v531 = vpop.permute.xlu0 %530
      %532 = vrot.lane.b32.xlu0 %v344, 17
      %v533 = vpop.permute.xlu0 %532
      %534 = vrot.lane.b32.xlu0 %v345, 17
      %v535 = vpop.permute.xlu0 %534
      %536 = vrot.lane.b32.xlu0 %v342, 17
      %v537 = vpop.permute.xlu0 %536
      %538 = vrot.lane.b32.xlu0 %v366, 17
      %v539 = vpop.permute.xlu0 %538
      %540 = vrot.lane.b32.xlu0 %v367, 17
      %v541 = vpop.permute.xlu0 %540
      %542 = vrot.lane.b32.xlu0 %v364, 17
      %v543 = vpop.permute.xlu0 %542
      %vm544 = vcmask 138240
      %v545 = vsel %vm544, %v527, %v529
      %v546 = vsel %vm544, %v529, %v531
      %v547 = vsel %vm544, %v533, %v535
      %v548 = vsel %vm544, %v535, %v537
      %v549 = vsel %vm544, %v539, %v541
      %v550 = vsel %vm544, %v541, %v543
      %v558 = vsel %vm479, %v446, 0
      %560 = vmatprep.subr.bf16.mxu0 0
      %561 = vmatpush1.bf16.msra.mxu0 0
      %562 = vmatprep.subr.bf16.mxu0 0
      %563 = vmatpush1.bf16.msra.mxu0 0
      %564 = vmatprep.subr.bf16.mxu0 0
      %565 = vmatpush1.bf16.msra.mxu0 0
      %566 = vmatprep.subr.bf16.mxu0 0
      %567 = vmatpush1.bf16.msra.mxu0 0
      %568 = vmatprep.subr.bf16.mxu0 0
      %569 = vmatpush1.bf16.msra.mxu0 0
      %570 = vmatprep.subr.bf16.mxu0 %v550
      %571 = vmatpush1.bf16.msra.mxu0 %v549
      %572 = vmatprep.subr.bf16.mxu0 %v548
      %573 = vmatpush1.bf16.msra.mxu0 %v547
      %574 = vmatprep.subr.bf16.mxu0 %v546
      %575 = vmatpush1.bf16.msra.mxu0 %v545
      %576 = vmatprep.subr.bf16.mxu0 0
      %577 = vmatpush2.bf16.msra.mxu0 0
      %578 = vmatprep.subr.bf16.mxu0 0
      %579 = vmatpush2.bf16.msra.mxu0 0
      %580 = vmatprep.subr.bf16.mxu0 0
      %581 = vmatpush2.bf16.msra.mxu0 0
      %582 = vmatprep.subr.bf16.mxu0 0
      %583 = vmatpush2.bf16.msra.mxu0 0
      %584 = vmatprep.subr.bf16.mxu0 0
      %585 = vmatpush2.bf16.msra.mxu0 0
      %586 = vmatprep.subr.bf16.mxu0 0
      %587 = vmatpush2.bf16.msra.mxu0 0
      %588 = vmatprep.subr.bf16.mxu0 0
      %589 = vmatpush2.bf16.msra.mxu0 0
      %590 = vmatprep.subr.bf16.mxu0 0
      %591 = vmatpush2.bf16.msra.mxu0 0
      %592 = vmatprep.mubr.bf16.mxu0 0
      %593 = vmatmul.mubr.bf16.gmra.mxu0 %v558
      %v594 = vpop.f32.mrf.mxu0
      %v595 = vadd.f32 %v518, %v594
      %v596 = vpop.f32.mrf.mxu0
      %v597 = vadd.f32 %v520, %v596
      %v598 = vpop.f32.mrf.mxu0
      %v599 = vadd.f32 %v522, %v598
      %v600 = vpop.f32.mrf.mxu0
      %v601 = vadd.f32 %v524, %v600
      %602 = vdwg.mxu0
      %603 = vrot.lane.b32.xlu0 %v283, 15
      %v604 = vpop.permute.xlu0 %603
      %v605 = vrot.slane %v604, 4
      %vm606 = vcmask 121856
      %v607 = vsel %vm606, %v605, %v604
      %v610 = vmul.bf16 %v380, %v607
      %v611 = vmul.bf16 %v382, %v605
      %v612 = vmul.bf16 %v381, %v607
      %v613 = vmul.bf16 %v383, %v605
      %614 = vrot.lane.b32.xlu0 %v299, 17
      %v615 = vpop.permute.xlu0 %614
      %v616 = vrot.slane %v615, 4
      %v617 = vsel %vm544, %v616, %v615
      %v620 = vmul.bf16 %v380, %v617
      %v621 = vmul.bf16 %v382, %v616
      %v622 = vmul.bf16 %v381, %v617
      %v623 = vmul.bf16 %v383, %v616
      %v628 = vunpack.c.l.b16 %v610
      %v629 = vunpack.c.h.b16 %v610
      %v630 = vunpack.c.l.b16 %v611
      %v631 = vunpack.c.l.b16 %v612
      %v632 = vunpack.c.h.b16 %v612
      %v633 = vunpack.c.l.b16 %v613
      %v634 = vpack.c.b16 %v631, %v628
      %v635 = vpack.c.b16 %v632, %v629
      %v636 = vpack.c.b16 %v633, %v630
      %v639 = vunpack.c.l.b16 %v382
      %v640 = vunpack.c.l.b16 %v383
      %v641 = vpack.c.b16 %v640, %v639
      %642 = vrot.lane.b32.xlu0 %v641, 127
      %v643 = vpop.permute.xlu0 %642
      %v644 = vsel %vm343, %v419, %v643
      %v649 = vunpack.c.l.b16 %v620
      %v650 = vunpack.c.h.b16 %v620
      %v651 = vunpack.c.l.b16 %v621
      %v652 = vunpack.c.l.b16 %v622
      %v653 = vunpack.c.h.b16 %v622
      %v654 = vunpack.c.l.b16 %v623
      %v655 = vpack.c.b16 %v652, %v649
      %v656 = vpack.c.b16 %v653, %v650
      %v657 = vpack.c.b16 %v654, %v651
      %658 = vrot.lane.b32.xlu0 %v655, 126
      %v659 = vpop.permute.xlu0 %658
      %660 = vrot.lane.b32.xlu0 %v656, 126
      %v661 = vpop.permute.xlu0 %660
      %662 = vrot.lane.b32.xlu0 %v657, 126
      %v663 = vpop.permute.xlu0 %662
      %v664 = vsel %vm365, %v659, %v661
      %v665 = vsel %vm365, %v661, %v663
      %v666 = vld [vmem:[%s2] sm:$0xff]
      %v667 = vld [vmem:[%s2 + $0x8] sm:$0xff]
      %v670 = vunpack.c.l.b16 %v666
      %v671 = vunpack.c.h.b16 %v666
      %v672 = vunpack.c.l.b16 %v667
      %v673 = vunpack.c.h.b16 %v667
      %v674 = vpack.c.b16 %v672, %v670
      %v675 = vpack.c.b16 %v673, %v671
      %676 = vrot.lane.b32.xlu0 %v674, 32
      %v677 = vpop.permute.xlu0 %676
      %678 = vrot.lane.b32.xlu0 %v675, 32
      %v679 = vpop.permute.xlu0 %678
      %vm680 = vcmask 261120
      %v681 = vsel %vm680, %v677, %v679
      %682 = vrot.lane.b32.xlu0 %v634, 113
      %v683 = vpop.permute.xlu0 %682
      %684 = vrot.lane.b32.xlu0 %v635, 113
      %v685 = vpop.permute.xlu0 %684
      %686 = vrot.lane.b32.xlu0 %v636, 113
      %v687 = vpop.permute.xlu0 %686
      %688 = vrot.lane.b32.xlu0 %v420, 113
      %v689 = vpop.permute.xlu0 %688
      %690 = vrot.lane.b32.xlu0 %v644, 113
      %v691 = vpop.permute.xlu0 %690
      %692 = vrot.lane.b32.xlu0 %v643, 113
      %v693 = vpop.permute.xlu0 %692
      %694 = vrot.lane.b32.xlu0 %v664, 113
      %v695 = vpop.permute.xlu0 %694
      %696 = vrot.lane.b32.xlu0 %v665, 113
      %v697 = vpop.permute.xlu0 %696
      %698 = vrot.lane.b32.xlu0 %v663, 113
      %v699 = vpop.permute.xlu0 %698
      %v700 = vsel %vm303, %v683, %v685
      %v701 = vsel %vm303, %v685, %v687
      %v702 = vsel %vm303, %v689, %v691
      %v703 = vsel %vm303, %v691, %v693
      %v704 = vsel %vm303, %v695, %v697
      %v705 = vsel %vm303, %v697, %v699
      %v713 = vsel %vm479, %v681, 0
      %715 = vmatprep.subr.bf16.mxu0 0
      %716 = vmatpush1.bf16.msra.mxu0 0
      %717 = vmatprep.subr.bf16.mxu0 0
      %718 = vmatpush1.bf16.msra.mxu0 0
      %719 = vmatprep.subr.bf16.mxu0 0
      %720 = vmatpush1.bf16.msra.mxu0 0
      %721 = vmatprep.subr.bf16.mxu0 0
      %722 = vmatpush1.bf16.msra.mxu0 0
      %723 = vmatprep.subr.bf16.mxu0 0
      %724 = vmatpush1.bf16.msra.mxu0 0
      %725 = vmatprep.subr.bf16.mxu0 %v705
      %726 = vmatpush1.bf16.msra.mxu0 %v704
      %727 = vmatprep.subr.bf16.mxu0 %v703
      %728 = vmatpush1.bf16.msra.mxu0 %v702
      %729 = vmatprep.subr.bf16.mxu0 %v701
      %730 = vmatpush1.bf16.msra.mxu0 %v700
      %731 = vmatprep.subr.bf16.mxu0 0
      %732 = vmatpush2.bf16.msra.mxu0 0
      %733 = vmatprep.subr.bf16.mxu0 0
      %734 = vmatpush2.bf16.msra.mxu0 0
      %735 = vmatprep.subr.bf16.mxu0 0
      %736 = vmatpush2.bf16.msra.mxu0 0
      %737 = vmatprep.subr.bf16.mxu0 0
      %738 = vmatpush2.bf16.msra.mxu0 0
      %739 = vmatprep.subr.bf16.mxu0 0
      %740 = vmatpush2.bf16.msra.mxu0 0
      %741 = vmatprep.subr.bf16.mxu0 0
      %742 = vmatpush2.bf16.msra.mxu0 0
      %743 = vmatprep.subr.bf16.mxu0 0
      %744 = vmatpush2.bf16.msra.mxu0 0
      %745 = vmatprep.subr.bf16.mxu0 0
      %746 = vmatpush2.bf16.msra.mxu0 0
      %747 = vmatprep.mubr.bf16.mxu0 0
      %748 = vmatmul.mubr.bf16.gmra.mxu0 %v713
      %v749 = vpop.f32.mrf.mxu0
      %v750 = vadd.f32 0.0, %v749
      %v751 = vpop.f32.mrf.mxu0
      %v752 = vadd.f32 0.0, %v751
      %v753 = vpop.f32.mrf.mxu0
      %v754 = vadd.f32 0.0, %v753
      %v755 = vpop.f32.mrf.mxu0
      %v756 = vadd.f32 0.0, %v755
      %757 = vdwg.mxu0
      %v758 = vadd.f32 %v595, %v750
      %v759 = vadd.f32 %v597, %v752
      %v760 = vadd.f32 %v599, %v754
      %v761 = vadd.f32 %v601, %v756
      %v762 = vadd.f32 %v758, %v759
      %763 = vadd.xlane.f32.xlu0 %v762
      %v764 = vpop.xlane.xlu0 %763
      %v765 = vadd.f32 %v760, %v761
      %766 = vadd.xlane.f32.xlu0 %v765
      %v767 = vpop.xlane.xlu0 %766
      %v768 = vrcp.pop 256.0
      %v769 = vmul.f32 %v764, %v768
      %v770 = vmul.f32 %v767, %v768
      %v771 = vsub.f32 %v758, %v769
      %v772 = vsub.f32 %v759, %v769
      %v773 = vsub.f32 %v760, %v770
      %v774 = vsub.f32 %v761, %v770
      %v775 = vmul.f32 %v771, %v771
      %v776 = vmul.f32 %v772, %v772
      %v777 = vmul.f32 %v773, %v773
      %v778 = vmul.f32 %v774, %v774
      %v779 = vadd.f32 %v775, %v776
      %780 = vadd.xlane.f32.xlu0 %v779
      %v781 = vpop.xlane.xlu0 %780
      %v782 = vadd.f32 %v777, %v778
      %783 = vadd.xlane.f32.xlu0 %v782
      %v784 = vpop.xlane.xlu0 %783
      %v785 = vmul.f32 %v781, %v768
      %v786 = vmul.f32 %v784, %v768
      %v787 = vadd.f32 %v785, 1e-05
      %v788 = vadd.f32 %v786, 1e-05
      %v789 = vrsqrt.pop %v787
      %v790 = vrsqrt.pop %v788
      %v791 = vmul.f32 %v771, %v789
      %v792 = vmul.f32 %v772, %v789
      %v793 = vmul.f32 %v773, %v790
      %v794 = vmul.f32 %v774, %v790
      %v795 = vmax.f32 %v791, 0.0
      %v796 = vmax.f32 %v792, 0.0
      %v797 = vmax.f32 %v793, 0.0
      %v798 = vmax.f32 %v794, 0.0
      %v799 = vpack.c.bf16 %v797, %v795
      %v800 = vpack.c.bf16 %v798, %v796
      %v803 = vunpack.c.l.b16 %v799
      %v804 = vunpack.c.l.b16 %v800
      %v805 = vunpack.c.h.b16 %v799
      %v806 = vunpack.c.h.b16 %v800
      %v807 = vpack.c.b16 %v804, %v803
      %v808 = vpack.c.b16 %v806, %v805
      %811 = vst [vmem:[#allocation3 + $0x4] sm:$0xff] %v807
      %812 = vst [vmem:[#allocation3 + $0x14] sm:$0xff] %v808
      %v813 = vld [vmem:[#allocation3] sm:$0xff]
      %v814 = vld [vmem:[#allocation3 + $0x8] sm:$0xf]
      %v815 = vld [vmem:[#allocation3 + $0x10] sm:$0xff]
      %v816 = vld [vmem:[#allocation3 + $0x18] sm:$0xf]
      %v817 = vmul.bf16 %v813, %v288
      %v818 = vmul.bf16 %v814, %v286
      %v819 = vmul.bf16 %v815, %v288
      %v820 = vmul.bf16 %v816, %v286
      %v821 = vmul.bf16 %v813, %v304
      %v822 = vmul.bf16 %v814, %v302
      %v823 = vmul.bf16 %v815, %v304
      %v824 = vmul.bf16 %v816, %v302
      %v829 = vunpack.c.l.b16 %v817
      %v830 = vunpack.c.h.b16 %v817
      %v831 = vunpack.c.l.b16 %v818
      %v832 = vunpack.c.l.b16 %v819
      %v833 = vunpack.c.h.b16 %v819
      %v834 = vunpack.c.l.b16 %v820
      %v835 = vpack.c.b16 %v832, %v829
      %v836 = vpack.c.b16 %v833, %v830
      %v837 = vpack.c.b16 %v834, %v831
      %v842 = vunpack.c.l.b16 %v813
      %v843 = vunpack.c.h.b16 %v813
      %v844 = vunpack.c.l.b16 %v814
      %v845 = vunpack.c.l.b16 %v815
      %v846 = vunpack.c.h.b16 %v815
      %v847 = vunpack.c.l.b16 %v816
      %v848 = vpack.c.b16 %v845, %v842
      %v849 = vpack.c.b16 %v846, %v843
      %v850 = vpack.c.b16 %v847, %v844
      %851 = vrot.lane.b32.xlu0 %v848, 127
      %v852 = vpop.permute.xlu0 %851
      %853 = vrot.lane.b32.xlu0 %v849, 127
      %v854 = vpop.permute.xlu0 %853
      %855 = vrot.lane.b32.xlu0 %v850, 127
      %v856 = vpop.permute.xlu0 %855
      %v857 = vsel %vm343, %v852, %v854
      %v858 = vsel %vm343, %v854, %v856
      %v863 = vunpack.c.l.b16 %v821
      %v864 = vunpack.c.h.b16 %v821
      %v865 = vunpack.c.l.b16 %v822
      %v866 = vunpack.c.l.b16 %v823
      %v867 = vunpack.c.h.b16 %v823
      %v868 = vunpack.c.l.b16 %v824
      %v869 = vpack.c.b16 %v866, %v863
      %v870 = vpack.c.b16 %v867, %v864
      %v871 = vpack.c.b16 %v868, %v865
      %872 = vrot.lane.b32.xlu0 %v869, 126
      %v873 = vpop.permute.xlu0 %872
      %874 = vrot.lane.b32.xlu0 %v870, 126
      %v875 = vpop.permute.xlu0 %874
      %876 = vrot.lane.b32.xlu0 %v871, 126
      %v877 = vpop.permute.xlu0 %876
      %v878 = vsel %vm365, %v873, %v875
      %v879 = vsel %vm365, %v875, %v877
      %v880 = vld [vmem:[%s3] sm:$0xf]
      %v881 = vld [vmem:[%s3 + $0x8] sm:$0xf]
      %v882 = vmul.bf16 %v813, %v373
      %v883 = vmul.bf16 %v814, %v372
      %v884 = vmul.bf16 %v815, %v373
      %v885 = vmul.bf16 %v816, %v372
      %v886 = vld [vmem:[#allocation3 + $0x4] sm:$0xff]
      %v887 = vld [vmem:[#allocation3 + $0x14] sm:$0xff]
      %v888 = vld [vmem:[#allocation3 + $0xc] sm:$0xf]
      %v889 = vld [vmem:[#allocation3 + $0x1c] sm:$0xf]
      %v890 = vmul.bf16 %v886, %v388
      %v891 = vmul.bf16 %v888, %v386
      %v892 = vmul.bf16 %v887, %v388
      %v893 = vmul.bf16 %v889, %v386
      %v898 = vunpack.c.l.b16 %v882
      %v899 = vunpack.c.h.b16 %v882
      %v900 = vunpack.c.l.b16 %v883
      %v901 = vunpack.c.l.b16 %v884
      %v902 = vunpack.c.h.b16 %v884
      %v903 = vunpack.c.l.b16 %v885
      %v904 = vpack.c.b16 %v901, %v898
      %v905 = vpack.c.b16 %v902, %v899
      %v906 = vpack.c.b16 %v903, %v900
      %v909 = vunpack.c.l.b16 %v886
      %v910 = vunpack.c.h.b16 %v886
      %v911 = vunpack.c.l.b16 %v887
      %v912 = vunpack.c.h.b16 %v887
      %v913 = vpack.c.b16 %v911, %v909
      %v914 = vpack.c.b16 %v912, %v910
      %915 = vrot.lane.b32.xlu0 %v913, 127
      %v916 = vpop.permute.xlu0 %915
      %917 = vrot.lane.b32.xlu0 %v914, 127
      %v918 = vpop.permute.xlu0 %917
      %v919 = vsel %vm343, %v916, %v918
      %v924 = vunpack.c.l.b16 %v890
      %v925 = vunpack.c.h.b16 %v890
      %v926 = vunpack.c.l.b16 %v891
      %v927 = vunpack.c.l.b16 %v892
      %v928 = vunpack.c.h.b16 %v892
      %v929 = vunpack.c.l.b16 %v893
      %v930 = vpack.c.b16 %v927, %v924
      %v931 = vpack.c.b16 %v928, %v925
      %v932 = vpack.c.b16 %v929, %v926
      %933 = vrot.lane.b32.xlu0 %v930, 126
      %v934 = vpop.permute.xlu0 %933
      %935 = vrot.lane.b32.xlu0 %v931, 126
      %v936 = vpop.permute.xlu0 %935
      %937 = vrot.lane.b32.xlu0 %v932, 126
      %v938 = vpop.permute.xlu0 %937
      %v939 = vsel %vm365, %v934, %v936
      %v940 = vsel %vm365, %v936, %v938
      %v943 = vunpack.c.l.b16 %v880
      %v944 = vunpack.c.l.b16 %v881
      %v945 = vpack.c.b16 %v944, %v943
      %946 = vrot.lane.b32.xlu0 %v945, 80
      %v947 = vpop.permute.xlu0 %946
      %948 = vrot.lane.b32.xlu0 %v904, 1
      %v949 = vpop.permute.xlu0 %948
      %950 = vrot.lane.b32.xlu0 %v905, 1
      %v951 = vpop.permute.xlu0 %950
      %952 = vrot.lane.b32.xlu0 %v906, 1
      %v953 = vpop.permute.xlu0 %952
      %954 = vrot.lane.b32.xlu0 %v916, 1
      %v955 = vpop.permute.xlu0 %954
      %956 = vrot.lane.b32.xlu0 %v919, 1
      %v957 = vpop.permute.xlu0 %956
      %958 = vrot.lane.b32.xlu0 %v918, 1
      %v959 = vpop.permute.xlu0 %958
      %960 = vrot.lane.b32.xlu0 %v934, 1
      %v961 = vpop.permute.xlu0 %960
      %962 = vrot.lane.b32.xlu0 %v939, 1
      %v963 = vpop.permute.xlu0 %962
      %964 = vrot.lane.b32.xlu0 %v940, 1
      %v965 = vpop.permute.xlu0 %964
      %v966 = vsel %vm387, %v949, %v951
      %v967 = vsel %vm387, %v951, %v953
      %v968 = vsel %vm387, %v955, %v957
      %v969 = vsel %vm387, %v957, %v959
      %v970 = vsel %vm387, %v961, %v963
      %v971 = vsel %vm387, %v963, %v965
      %v979 = vsel %vm479, %v947, 0
      %981 = vmatprep.subr.bf16.mxu0 0
      %982 = vmatpush1.bf16.msra.mxu0 0
      %983 = vmatprep.subr.bf16.mxu0 0
      %984 = vmatpush1.bf16.msra.mxu0 0
      %985 = vmatprep.subr.bf16.mxu0 0
      %986 = vmatpush1.bf16.msra.mxu0 0
      %987 = vmatprep.subr.bf16.mxu0 0
      %988 = vmatpush1.bf16.msra.mxu0 0
      %989 = vmatprep.subr.bf16.mxu0 0
      %990 = vmatpush1.bf16.msra.mxu0 0
      %991 = vmatprep.subr.bf16.mxu0 %v971
      %992 = vmatpush1.bf16.msra.mxu0 %v970
      %993 = vmatprep.subr.bf16.mxu0 %v969
      %994 = vmatpush1.bf16.msra.mxu0 %v968
      %995 = vmatprep.subr.bf16.mxu0 %v967
      %996 = vmatpush1.bf16.msra.mxu0 %v966
      %997 = vmatprep.subr.bf16.mxu0 0
      %998 = vmatpush2.bf16.msra.mxu0 0
      %999 = vmatprep.subr.bf16.mxu0 0
      %1000 = vmatpush2.bf16.msra.mxu0 0
      %1001 = vmatprep.subr.bf16.mxu0 0
      %1002 = vmatpush2.bf16.msra.mxu0 0
      %1003 = vmatprep.subr.bf16.mxu0 0
      %1004 = vmatpush2.bf16.msra.mxu0 0
      %1005 = vmatprep.subr.bf16.mxu0 0
      %1006 = vmatpush2.bf16.msra.mxu0 0
      %1007 = vmatprep.subr.bf16.mxu0 0
      %1008 = vmatpush2.bf16.msra.mxu0 0
      %1009 = vmatprep.subr.bf16.mxu0 0
      %1010 = vmatpush2.bf16.msra.mxu0 0
      %1011 = vmatprep.subr.bf16.mxu0 0
      %1012 = vmatpush2.bf16.msra.mxu0 0
      %1013 = vmatprep.mubr.bf16.mxu0 0
      %1014 = vmatmul.mubr.bf16.gmra.mxu0 %v979
      %v1015 = vpop.f32.mrf.mxu0
      %v1016 = vadd.f32 0.0, %v1015
      %v1017 = vpop.f32.mrf.mxu0
      %v1018 = vadd.f32 0.0, %v1017
      %v1019 = vpop.f32.mrf.mxu0
      %v1020 = vadd.f32 0.0, %v1019
      %v1021 = vpop.f32.mrf.mxu0
      %v1022 = vadd.f32 0.0, %v1021
      %1023 = vdwg.mxu0
      %1024 = vrot.lane.b32.xlu0 %v835, 17
      %v1025 = vpop.permute.xlu0 %1024
      %1026 = vrot.lane.b32.xlu0 %v836, 17
      %v1027 = vpop.permute.xlu0 %1026
      %1028 = vrot.lane.b32.xlu0 %v837, 17
      %v1029 = vpop.permute.xlu0 %1028
      %1030 = vrot.lane.b32.xlu0 %v857, 17
      %v1031 = vpop.permute.xlu0 %1030
      %1032 = vrot.lane.b32.xlu0 %v858, 17
      %v1033 = vpop.permute.xlu0 %1032
      %1034 = vrot.lane.b32.xlu0 %v856, 17
      %v1035 = vpop.permute.xlu0 %1034
      %1036 = vrot.lane.b32.xlu0 %v878, 17
      %v1037 = vpop.permute.xlu0 %1036
      %1038 = vrot.lane.b32.xlu0 %v879, 17
      %v1039 = vpop.permute.xlu0 %1038
      %1040 = vrot.lane.b32.xlu0 %v877, 17
      %v1041 = vpop.permute.xlu0 %1040
      %v1042 = vsel %vm544, %v1025, %v1027
      %v1043 = vsel %vm544, %v1027, %v1029
      %v1044 = vsel %vm544, %v1031, %v1033
      %v1045 = vsel %vm544, %v1033, %v1035
      %v1046 = vsel %vm544, %v1037, %v1039
      %v1047 = vsel %vm544, %v1039, %v1041
      %v1055 = vsel %vm479, %v945, 0
      %1057 = vmatprep.subr.bf16.mxu0 0
      %1058 = vmatpush1.bf16.msra.mxu0 0
      %1059 = vmatprep.subr.bf16.mxu0 0
      %1060 = vmatpush1.bf16.msra.mxu0 0
      %1061 = vmatprep.subr.bf16.mxu0 0
      %1062 = vmatpush1.bf16.msra.mxu0 0
      %1063 = vmatprep.subr.bf16.mxu0 0
      %1064 = vmatpush1.bf16.msra.mxu0 0
      %1065 = vmatprep.subr.bf16.mxu0 0
      %1066 = vmatpush1.bf16.msra.mxu0 0
      %1067 = vmatprep.subr.bf16.mxu0 %v1047
      %1068 = vmatpush1.bf16.msra.mxu0 %v1046
      %1069 = vmatprep.subr.bf16.mxu0 %v1045
      %1070 = vmatpush1.bf16.msra.mxu0 %v1044
      %1071 = vmatprep.subr.bf16.mxu0 %v1043
      %1072 = vmatpush1.bf16.msra.mxu0 %v1042
      %1073 = vmatprep.subr.bf16.mxu0 0
      %1074 = vmatpush2.bf16.msra.mxu0 0
      %1075 = vmatprep.subr.bf16.mxu0 0
      %1076 = vmatpush2.bf16.msra.mxu0 0
      %1077 = vmatprep.subr.bf16.mxu0 0
      %1078 = vmatpush2.bf16.msra.mxu0 0
      %1079 = vmatprep.subr.bf16.mxu0 0
      %1080 = vmatpush2.bf16.msra.mxu0 0
      %1081 = vmatprep.subr.bf16.mxu0 0
      %1082 = vmatpush2.bf16.msra.mxu0 0
      %1083 = vmatprep.subr.bf16.mxu0 0
      %1084 = vmatpush2.bf16.msra.mxu0 0
      %1085 = vmatprep.subr.bf16.mxu0 0
      %1086 = vmatpush2.bf16.msra.mxu0 0
      %1087 = vmatprep.subr.bf16.mxu0 0
      %1088 = vmatpush2.bf16.msra.mxu0 0
      %1089 = vmatprep.mubr.bf16.mxu0 0
      %1090 = vmatmul.mubr.bf16.gmra.mxu0 %v1055
      %v1091 = vpop.f32.mrf.mxu0
      %v1092 = vadd.f32 %v1016, %v1091
      %v1093 = vpop.f32.mrf.mxu0
      %v1094 = vadd.f32 %v1018, %v1093
      %v1095 = vpop.f32.mrf.mxu0
      %v1096 = vadd.f32 %v1020, %v1095
      %v1097 = vpop.f32.mrf.mxu0
      %v1098 = vadd.f32 %v1022, %v1097
      %1099 = vdwg.mxu0
      %v1100 = vmul.bf16 %v886, %v607
      %v1101 = vmul.bf16 %v888, %v605
      %v1102 = vmul.bf16 %v887, %v607
      %v1103 = vmul.bf16 %v889, %v605
      %v1104 = vmul.bf16 %v886, %v617
      %v1105 = vmul.bf16 %v888, %v616
      %v1106 = vmul.bf16 %v887, %v617
      %v1107 = vmul.bf16 %v889, %v616
      %v1112 = vunpack.c.l.b16 %v1100
      %v1113 = vunpack.c.h.b16 %v1100
      %v1114 = vunpack.c.l.b16 %v1101
      %v1115 = vunpack.c.l.b16 %v1102
      %v1116 = vunpack.c.h.b16 %v1102
      %v1117 = vunpack.c.l.b16 %v1103
      %v1118 = vpack.c.b16 %v1115, %v1112
      %v1119 = vpack.c.b16 %v1116, %v1113
      %v1120 = vpack.c.b16 %v1117, %v1114
      %v1123 = vunpack.c.l.b16 %v888
      %v1124 = vunpack.c.l.b16 %v889
      %v1125 = vpack.c.b16 %v1124, %v1123
      %1126 = vrot.lane.b32.xlu0 %v1125, 127
      %v1127 = vpop.permute.xlu0 %1126
      %v1128 = vsel %vm343, %v918, %v1127
      %v1133 = vunpack.c.l.b16 %v1104
      %v1134 = vunpack.c.h.b16 %v1104
      %v1135 = vunpack.c.l.b16 %v1105
      %v1136 = vunpack.c.l.b16 %v1106
      %v1137 = vunpack.c.h.b16 %v1106
      %v1138 = vunpack.c.l.b16 %v1107
      %v1139 = vpack.c.b16 %v1136, %v1133
      %v1140 = vpack.c.b16 %v1137, %v1134
      %v1141 = vpack.c.b16 %v1138, %v1135
      %1142 = vrot.lane.b32.xlu0 %v1139, 126
      %v1143 = vpop.permute.xlu0 %1142
      %1144 = vrot.lane.b32.xlu0 %v1140, 126
      %v1145 = vpop.permute.xlu0 %1144
      %1146 = vrot.lane.b32.xlu0 %v1141, 126
      %v1147 = vpop.permute.xlu0 %1146
      %v1148 = vsel %vm365, %v1143, %v1145
      %v1149 = vsel %vm365, %v1145, %v1147
      %v1150 = vld [vmem:[%s3] sm:$0xff]
      %v1151 = vld [vmem:[%s3 + $0x8] sm:$0xff]
      %v1154 = vunpack.c.l.b16 %v1150
      %v1155 = vunpack.c.h.b16 %v1150
      %v1156 = vunpack.c.l.b16 %v1151
      %v1157 = vunpack.c.h.b16 %v1151
      %v1158 = vpack.c.b16 %v1156, %v1154
      %v1159 = vpack.c.b16 %v1157, %v1155
      %1160 = vrot.lane.b32.xlu0 %v1158, 32
      %v1161 = vpop.permute.xlu0 %1160
      %1162 = vrot.lane.b32.xlu0 %v1159, 32
      %v1163 = vpop.permute.xlu0 %1162
      %v1164 = vsel %vm680, %v1161, %v1163
      %1165 = vrot.lane.b32.xlu0 %v1118, 113
      %v1166 = vpop.permute.xlu0 %1165
      %1167 = vrot.lane.b32.xlu0 %v1119, 113
      %v1168 = vpop.permute.xlu0 %1167
      %1169 = vrot.lane.b32.xlu0 %v1120, 113
      %v1170 = vpop.permute.xlu0 %1169
      %1171 = vrot.lane.b32.xlu0 %v919, 113
      %v1172 = vpop.permute.xlu0 %1171
      %1173 = vrot.lane.b32.xlu0 %v1128, 113
      %v1174 = vpop.permute.xlu0 %1173
      %1175 = vrot.lane.b32.xlu0 %v1127, 113
      %v1176 = vpop.permute.xlu0 %1175
      %1177 = vrot.lane.b32.xlu0 %v1148, 113
      %v1178 = vpop.permute.xlu0 %1177
      %1179 = vrot.lane.b32.xlu0 %v1149, 113
      %v1180 = vpop.permute.xlu0 %1179
      %1181 = vrot.lane.b32.xlu0 %v1147, 113
      %v1182 = vpop.permute.xlu0 %1181
      %v1183 = vsel %vm303, %v1166, %v1168
      %v1184 = vsel %vm303, %v1168, %v1170
      %v1185 = vsel %vm303, %v1172, %v1174
      %v1186 = vsel %vm303, %v1174, %v1176
      %v1187 = vsel %vm303, %v1178, %v1180
      %v1188 = vsel %vm303, %v1180, %v1182
      %v1196 = vsel %vm479, %v1164, 0
      %1198 = vmatprep.subr.bf16.mxu0 0
      %1199 = vmatpush1.bf16.msra.mxu0 0
      %1200 = vmatprep.subr.bf16.mxu0 0
      %1201 = vmatpush1.bf16.msra.mxu0 0
      %1202 = vmatprep.subr.bf16.mxu0 0
      %1203 = vmatpush1.bf16.msra.mxu0 0
      %1204 = vmatprep.subr.bf16.mxu0 0
      %1205 = vmatpush1.bf16.msra.mxu0 0
      %1206 = vmatprep.subr.bf16.mxu0 0
      %1207 = vmatpush1.bf16.msra.mxu0 0
      %1208 = vmatprep.subr.bf16.mxu0 %v1188
      %1209 = vmatpush1.bf16.msra.mxu0 %v1187
      %1210 = vmatprep.subr.bf16.mxu0 %v1186
      %1211 = vmatpush1.bf16.msra.mxu0 %v1185
      %1212 = vmatprep.subr.bf16.mxu0 %v1184
      %1213 = vmatpush1.bf16.msra.mxu0 %v1183
      %1214 = vmatprep.subr.bf16.mxu0 0
      %1215 = vmatpush2.bf16.msra.mxu0 0
      %1216 = vmatprep.subr.bf16.mxu0 0
      %1217 = vmatpush2.bf16.msra.mxu0 0
      %1218 = vmatprep.subr.bf16.mxu0 0
      %1219 = vmatpush2.bf16.msra.mxu0 0
      %1220 = vmatprep.subr.bf16.mxu0 0
      %1221 = vmatpush2.bf16.msra.mxu0 0
      %1222 = vmatprep.subr.bf16.mxu0 0
      %1223 = vmatpush2.bf16.msra.mxu0 0
      %1224 = vmatprep.subr.bf16.mxu0 0
      %1225 = vmatpush2.bf16.msra.mxu0 0
      %1226 = vmatprep.subr.bf16.mxu0 0
      %1227 = vmatpush2.bf16.msra.mxu0 0
      %1228 = vmatprep.subr.bf16.mxu0 0
      %1229 = vmatpush2.bf16.msra.mxu0 0
      %1230 = vmatprep.mubr.bf16.mxu0 0
      %1231 = vmatmul.mubr.bf16.gmra.mxu0 %v1196
      %v1232 = vpop.f32.mrf.mxu0
      %v1233 = vadd.f32 0.0, %v1232
      %v1234 = vpop.f32.mrf.mxu0
      %v1235 = vadd.f32 0.0, %v1234
      %v1236 = vpop.f32.mrf.mxu0
      %v1237 = vadd.f32 0.0, %v1236
      %v1238 = vpop.f32.mrf.mxu0
      %v1239 = vadd.f32 0.0, %v1238
      %1240 = vdwg.mxu0
      %v1241 = vadd.f32 %v1092, %v1233
      %v1242 = vadd.f32 %v1094, %v1235
      %v1243 = vadd.f32 %v1096, %v1237
      %v1244 = vadd.f32 %v1098, %v1239
      %v1245 = vadd.f32 %v1241, %v1242
      %1246 = vadd.xlane.f32.xlu0 %v1245
      %v1247 = vpop.xlane.xlu0 %1246
      %v1248 = vadd.f32 %v1243, %v1244
      %1249 = vadd.xlane.f32.xlu0 %v1248
      %v1250 = vpop.xlane.xlu0 %1249
      %v1251 = vmul.f32 %v1247, %v768
      %v1252 = vmul.f32 %v1250, %v768
      %v1253 = vsub.f32 %v1241, %v1251
      %v1254 = vsub.f32 %v1242, %v1251
      %v1255 = vsub.f32 %v1243, %v1252
      %v1256 = vsub.f32 %v1244, %v1252
      %v1257 = vmul.f32 %v1253, %v1253
      %v1258 = vmul.f32 %v1254, %v1254
      %v1259 = vmul.f32 %v1255, %v1255
      %v1260 = vmul.f32 %v1256, %v1256
      %v1261 = vadd.f32 %v1257, %v1258
      %1262 = vadd.xlane.f32.xlu0 %v1261
      %v1263 = vpop.xlane.xlu0 %1262
      %v1264 = vadd.f32 %v1259, %v1260
      %1265 = vadd.xlane.f32.xlu0 %v1264
      %v1266 = vpop.xlane.xlu0 %1265
      %v1267 = vmul.f32 %v1263, %v768
      %v1268 = vmul.f32 %v1266, %v768
      %v1269 = vadd.f32 %v1267, 1e-05
      %v1270 = vadd.f32 %v1268, 1e-05
      %v1271 = vrsqrt.pop %v1269
      %v1272 = vrsqrt.pop %v1270
      %v1273 = vmul.f32 %v1253, %v1271
      %v1274 = vmul.f32 %v1254, %v1271
      %v1275 = vmul.f32 %v1255, %v1272
      %v1276 = vmul.f32 %v1256, %v1272
      %v1277 = vmax.f32 %v1273, 0.0
      %v1278 = vmax.f32 %v1274, 0.0
      %v1279 = vmax.f32 %v1275, 0.0
      %v1280 = vmax.f32 %v1276, 0.0
      %v1281 = vpack.c.bf16 %v1279, %v1277
      %v1282 = vpack.c.bf16 %v1280, %v1278
      %v1285 = vunpack.c.l.b16 %v1281
      %v1286 = vunpack.c.l.b16 %v1282
      %v1287 = vunpack.c.h.b16 %v1281
      %v1288 = vunpack.c.h.b16 %v1282
      %v1289 = vpack.c.b16 %v1286, %v1285
      %v1290 = vpack.c.b16 %v1288, %v1287
      %1293 = vst [vmem:[%s217] sm:$0xff] %v1289
      %1294 = vst [vmem:[%s217 + $0x8] sm:$0xff] %v1290
      %p1295 = scmp.lt.s32.totalorder %s15, 1
      %s1296 = scalar_select %p1295, %s15, 1
      %s1297 = smul.addr %s1296, 4
      %s1298 = smul.addr %s1297, 4
      %s1299 = scalar_lea.vmem %s4, %s1298
      // Predicated region
      $region37: #{up_forward.1} parent=35 // pred_check
        %p1300 = pneg %p127
      $region38: #{up_forward.1} parent=35 // pred_check_branch
        %1302 = sbr.rel (%p1300) target = $region40
      $region39: #{up_forward.1} parent=35 // pred_region
        _
      $region40: #{up_forward.1} parent=35 // pred_fallthru
        _
    $region36: #{up_forward.1} parent=5 // pred_fallthru
      _
    %p1303 = scmp.le.s32.totalorder 2, %s10
    // Predicated region
    $region41: #{up_forward.1} parent=5 // pred_check
      %p1304 = pneg %p1303
    $region42: #{up_forward.1} parent=5 // pred_check_branch
      %1306 = sbr.rel (%p1304) target = $region44
    $region43: #{up_forward.1} parent=5 // pred_region
      %s1307 = ssub.s32 %s10, 2
      // Predicated region
      $region45: #{up_forward.1} parent=43 // pred_check
        %p1308 = pneg %p133
      $region46: #{up_forward.1} parent=43 // pred_check_branch
        %1310 = sbr.rel (%p1308) target = $region48
      $region47: #{up_forward.1} parent=43 // pred_region
        %p1311 = scmp.lt.s32.totalorder %s16, 1
        %s1312 = scalar_select %p1311, %s16, 1
        %s1313 = smul.addr %s1312, 4
        %s1314 = smul.addr %s1313, 4
        %s1315 = scalar_lea.vmem %s4, %s1314
      $region48: #{up_forward.1} parent=43 // pred_fallthru
        _
    $region44: #{up_forward.1} parent=5 // pred_fallthru
      _
  $region6: #{up_forward.1} parent=0 // loop_footer
    %s14 = sadd.s32 1, %s10
  $region7: #{up_forward.1} parent=0 // loop_footer_branch
    %9 = sbr.rel target = $region3
  $region8: #{up_forward.1} parent=0 // loop_exit
    _

</llo_original>
